<compile_context>
chip_gen: v6e
topology: v6e:2x2x1
jax: 0.10.0
libtpu: 0.0.40
codegen_flags: <defaults>
</compile_context>

<pallas_src>
import functools
import math

import jax
import jax.numpy as jnp
from jax import lax
from jax.experimental import pallas as pl
from jax.experimental.pallas import tpu as pltpu


# ----------------------------------------------------------------------------
# Helpers
# ----------------------------------------------------------------------------

def _row_tile(M):
    """Large row tile, but keep >=2 grid steps when possible (v7x dual TC)."""
    for t in (512, 256, 128):
        if M % t == 0 and M // t >= 2:
            return t
    half = M // 2
    if M % 2 == 0 and half % 8 == 0:
        return half
    return M


def _parallel(n_axes):
    return pltpu.CompilerParams(dimension_semantics=("parallel",) * n_axes)


def _layer_norm(y, g, b, eps=1e-5):
    mu = jnp.mean(y, axis=-1, keepdims=True)
    d = y - mu
    var = jnp.mean(d * d, axis=-1, keepdims=True)
    return d * lax.rsqrt(var + eps) * g + b


def _mha(q, k, v, num_head, scale, add_mask, causal):
    """Multi-head attention on (Sq, D) / (Sk, D) f32 activations.

    One batched contraction over the head axis (no per-head loop, no .T).
    """
    Sq, D = q.shape
    Sk = k.shape[0]
    dk = D // num_head
    qh = q.reshape(Sq, num_head, dk).astype(jnp.bfloat16)
    kh = k.reshape(Sk, num_head, dk).astype(jnp.bfloat16)
    vh = v.reshape(Sk, num_head, dk).astype(jnp.bfloat16)
    # (H, Sq, Sk) scores, f32 accumulation on the MXU.
    s = jnp.einsum("qhd,khd->hqk", qh, kh,
                   preferred_element_type=jnp.float32) * scale
    if causal:  # generated in-kernel: no mask HBM traffic
        row = lax.broadcasted_iota(jnp.int32, (Sq, Sk), 0)
        col = lax.broadcasted_iota(jnp.int32, (Sq, Sk), 1)
        s = jnp.where((row >= col)[None], s, -1e9)
    if add_mask is not None:  # (Sq, Sk) additive mask, broadcast over heads
        s = s + add_mask[None]
    s = s - jnp.max(s, axis=-1, keepdims=True)
    p = jnp.exp(s)
    inv = pl.reciprocal(jnp.sum(p, axis=-1, keepdims=True), approx=True)
    p = (p * inv).astype(jnp.bfloat16)
    o = jnp.einsum("hqk,khd->qhd", p, vh, preferred_element_type=jnp.float32)
    return o.reshape(Sq, D)


def _dense(x_f32, w_ref, b_ref):
    """x @ w + b with bf16 operands and f32 accumulation."""
    return (jnp.dot(x_f32.astype(jnp.bfloat16), w_ref[...],
                    preferred_element_type=jnp.float32) + b_ref[...])


# ----------------------------------------------------------------------------
# Fused per-layer kernels
# ----------------------------------------------------------------------------

def _encoder_layer_kernel(*refs, num_head, has_mask):
    if has_mask:
        (x_ref, w_qkv, b_qkv, w_o, b_o, g1, be1,
         w1, b1, w2, b2, g2, be2, m_ref, o_ref) = refs
        add_mask = m_ref[0]
    else:
        (x_ref, w_qkv, b_qkv, w_o, b_o, g1, be1,
         w1, b1, w2, b2, g2, be2, o_ref) = refs
        add_mask = None

    x = x_ref[0]                                   # (S, D) f32
    D = x.shape[-1]
    scale = 1.0 / math.sqrt(D // num_head)

    # Self-attention (fused QKV projection) + out-proj + add & norm.
    qkv = _dense(x, w_qkv, b_qkv)                  # (S, 3D)
    attn = _mha(qkv[:, :D], qkv[:, D:2 * D], qkv[:, 2 * D:],
                num_head, scale, add_mask, causal=False)
    y = _layer_norm(x + _dense(attn, w_o, b_o), g1[...], be1[...])

    # Feed-forward + add & norm.
    h = jnp.maximum(_dense(y, w1, b1), 0.0)
    z = _layer_norm(y + _dense(h, w2, b2), g2[...], be2[...])
    o_ref[0] = z.astype(o_ref.dtype)


def _decoder_layer_kernel(*refs, num_head, has_tgt_mask, has_src_mask,
                          tgt_causal):
    (y_ref, enc_ref,
     sw_qkv, sb_qkv, sw_o, sb_o, g1, be1,
     cw_q, cb_q, cw_kv, cb_kv, cw_o, cb_o, g2, be2,
     w1, b1, w2, b2, g3, be3) = refs[:22]
    pos = 22
    tgt_mask = None
    src_mask = None
    if has_tgt_mask:
        tgt_mask = refs[pos][0]
        pos += 1
    if has_src_mask:
        src_mask = refs[pos][0]
        pos += 1
    o_ref = refs[pos]

    y = y_ref[0]                                   # (S, D) f32
    enc = enc_ref[0]                               # (Se, D) f32
    D = y.shape[-1]
    scale = 1.0 / math.sqrt(D // num_head)

    # Masked self-attention + out-proj + add & norm.
    qkv = _dense(y, sw_qkv, sb_qkv)
    attn = _mha(qkv[:, :D], qkv[:, D:2 * D], qkv[:, 2 * D:],
                num_head, scale, tgt_mask, causal=tgt_causal)
    y1 = _layer_norm(y + _dense(attn, sw_o, sb_o), g1[...], be1[...])

    # Cross-attention (Q from decoder, fused K/V from encoder output).
    q = _dense(y1, cw_q, cb_q)
    kv = _dense(enc, cw_kv, cb_kv)                 # (Se, 2D)
    cross = _mha(q, kv[:, :D], kv[:, D:], num_head, scale, src_mask,
                 causal=False)
    y2 = _layer_norm(y1 + _dense(cross, cw_o, cb_o), g2[...], be2[...])

    # Feed-forward + add & norm.
    h = jnp.maximum(_dense(y2, w1, b1), 0.0)
    z = _layer_norm(y2 + _dense(h, w2, b2), g3[...], be3[...])
    o_ref[0] = z.astype(o_ref.dtype)


def _linear_softmax_kernel(x_ref, w_ref, b_ref, o_ref):
    """softmax(x @ w + b) over the last dim — logits never leave VMEM.

    Exact normalization (no approx reciprocal) for parity with torch.softmax.
    """
    y = _dense(x_ref[...], w_ref, b_ref)
    y = y - jnp.max(y, axis=-1, keepdims=True)
    e = jnp.exp(y)
    o_ref[...] = (e / jnp.sum(e, axis=-1, keepdims=True)).astype(o_ref.dtype)


# ----------------------------------------------------------------------------
# pallas_call wrappers
# ----------------------------------------------------------------------------

def encoder_layer(x, p, add_mask, num_head):
    B, S, D = x.shape
    has_mask = add_mask is not None
    mha, f1, f2 = p["mha"], p["ffn1"], p["ffn2"]
    args = [x,
            mha["w_qkv"], mha["b_qkv"], mha["w_o"], mha["b_o"],
            p["ln1"]["g"], p["ln1"]["b"],
            f1["w"], f1["b"], f2["w"], f2["b"],
            p["ln2"]["g"], p["ln2"]["b"]]
    in_specs = [pl.BlockSpec((1, S, D), lambda b: (b, 0, 0))]
    in_specs += [pl.BlockSpec(a.shape, lambda b: (0, 0)) for a in args[1:]]
    if has_mask:
        args.append(add_mask)
        in_specs.append(pl.BlockSpec((1, S, S), lambda b: (b, 0, 0)))
    kernel = functools.partial(_encoder_layer_kernel, num_head=num_head,
                               has_mask=has_mask)
    return pl.pallas_call(
        kernel,
        out_shape=jax.ShapeDtypeStruct((B, S, D), jnp.float32),
        grid=(B,),
        in_specs=in_specs,
        out_specs=pl.BlockSpec((1, S, D), lambda b: (b, 0, 0)),
        compiler_params=_parallel(1),
    )(*args)


def decoder_layer(y, enc_out, p, tgt_add, src_add, num_head, tgt_causal):
    B, S, D = y.shape
    Se = enc_out.shape[1]
    sp, cp = p["self_mha"], p["cross_mha"]
    args = [y, enc_out,
            sp["w_qkv"], sp["b_qkv"], sp["w_o"], sp["b_o"],
            p["ln1"]["g"], p["ln1"]["b"],
            cp["w_q"], cp["b_q"], cp["w_kv"], cp["b_kv"], cp["w_o"], cp["b_o"],
            p["ln2"]["g"], p["ln2"]["b"],
            p["ffn1"]["w"], p["ffn1"]["b"], p["ffn2"]["w"], p["ffn2"]["b"],
            p["ln3"]["g"], p["ln3"]["b"]]
    in_specs = [pl.BlockSpec((1, S, D), lambda b: (b, 0, 0)),
                pl.BlockSpec((1, Se, D), lambda b: (b, 0, 0))]
    in_specs += [pl.BlockSpec(a.shape, lambda b: (0, 0)) for a in args[2:]]
    has_tgt = tgt_add is not None
    has_src = src_add is not None
    if has_tgt:
        args.append(tgt_add)
        in_specs.append(pl.BlockSpec((1, S, S), lambda b: (b, 0, 0)))
    if has_src:
        args.append(src_add)
        in_specs.append(pl.BlockSpec((1, S, Se), lambda b: (b, 0, 0)))
    kernel = functools.partial(_decoder_layer_kernel, num_head=num_head,
                               has_tgt_mask=has_tgt, has_src_mask=has_src,
                               tgt_causal=tgt_causal)
    return pl.pallas_call(
        kernel,
        out_shape=jax.ShapeDtypeStruct((B, S, D), jnp.float32),
        grid=(B,),
        in_specs=in_specs,
        out_specs=pl.BlockSpec((1, S, D), lambda b: (b, 0, 0)),
        compiler_params=_parallel(1),
    )(*args)


def linear_softmax(x, w, b):
    M, K = x.shape
    V = w.shape[1]
    tm = _row_tile(M)
    return pl.pallas_call(
        _linear_softmax_kernel,
        out_shape=jax.ShapeDtypeStruct((M, V), jnp.float32),
        grid=(M // tm,),
        in_specs=[
            pl.BlockSpec((tm, K), lambda i: (i, 0)),
            pl.BlockSpec((K, V), lambda i: (0, 0)),
            pl.BlockSpec((1, V), lambda i: (0, 0)),
        ],
        out_specs=pl.BlockSpec((tm, V), lambda i: (i, 0)),
        compiler_params=_parallel(1),
    )(x, w, b)


# ----------------------------------------------------------------------------
# Model glue (plain JAX: embedding gather, PE, parameter bookkeeping)
# ----------------------------------------------------------------------------

def sinusoidal_pe(max_seq_len, d_model):
    pos = jnp.arange(max_seq_len, dtype=jnp.float32)[:, None]
    i = jnp.arange(0, d_model, 2, dtype=jnp.float32)[None, :]
    angle = pos / jnp.power(10000.0, i / d_model)
    pe = jnp.zeros((max_seq_len, d_model), jnp.float32)
    pe = pe.at[:, 0::2].set(jnp.sin(angle))
    pe = pe.at[:, 1::2].set(jnp.cos(angle))
    return pe


def _w(key, d_in, d_out):
    # Weights stored bf16 in HBM (halved DMA bytes); f32 accumulation in-kernel.
    return (jax.random.normal(key, (d_in, d_out), jnp.float32) * 0.02
            ).astype(jnp.bfloat16)


def _dense_params(key, d_in, d_out):
    return {"w": _w(key, d_in, d_out), "b": jnp.zeros((1, d_out), jnp.float32)}


def _self_mha_params(key, d):
    k1, k2 = jax.random.split(key)
    return {"w_qkv": _w(k1, d, 3 * d), "b_qkv": jnp.zeros((1, 3 * d), jnp.float32),
            "w_o": _w(k2, d, d), "b_o": jnp.zeros((1, d), jnp.float32)}


def _cross_mha_params(key, d):
    k1, k2, k3 = jax.random.split(key, 3)
    return {"w_q": _w(k1, d, d), "b_q": jnp.zeros((1, d), jnp.float32),
            "w_kv": _w(k2, d, 2 * d), "b_kv": jnp.zeros((1, 2 * d), jnp.float32),
            "w_o": _w(k3, d, d), "b_o": jnp.zeros((1, d), jnp.float32)}


def _ln_params(d):
    return {"g": jnp.ones((1, d), jnp.float32),
            "b": jnp.zeros((1, d), jnp.float32)}


def _enc_layer_params(key, d, ffn):
    ks = jax.random.split(key, 3)
    return {"mha": _self_mha_params(ks[0], d),
            "ln1": _ln_params(d), "ln2": _ln_params(d),
            "ffn1": _dense_params(ks[1], d, ffn),
            "ffn2": _dense_params(ks[2], ffn, d)}


def _dec_layer_params(key, d, ffn):
    ks = jax.random.split(key, 4)
    return {"self_mha": _self_mha_params(ks[0], d),
            "cross_mha": _cross_mha_params(ks[1], d),
            "ln1": _ln_params(d), "ln2": _ln_params(d), "ln3": _ln_params(d),
            "ffn1": _dense_params(ks[2], d, ffn),
            "ffn2": _dense_params(ks[3], ffn, d)}


def init_transformer_params(key, input_vocab, target_vocab, d_model,
                            max_seq_len, num_layers, ffn_hidden):
    ks = jax.random.split(key, 3 + 2 * num_layers)
    return {
        "enc_emb": jax.random.normal(ks[0], (input_vocab, d_model),
                                     jnp.float32) * 0.02,
        # Mirrors the reference: Decoder(input_vocab_size, ...) — the decoder
        # embedding table uses input_vocab_size.
        "dec_emb": jax.random.normal(ks[1], (input_vocab, d_model),
                                     jnp.float32) * 0.02,
        "pe": sinusoidal_pe(max_seq_len, d_model),
        "out_proj": _dense_params(ks[2], d_model, target_vocab),
        "enc_layers": [_enc_layer_params(ks[3 + i], d_model, ffn_hidden)
                       for i in range(num_layers)],
        "dec_layers": [_dec_layer_params(ks[3 + num_layers + i], d_model,
                                         ffn_hidden)
                       for i in range(num_layers)],
    }


def _prep_mask(mask, B, Sq, Sk):
    """Boolean (True = attend) mask broadcastable to (B,1,Sq,Sk) -> additive."""
    if mask is None:
        return None
    m = jnp.broadcast_to(mask, (B, 1, Sq, Sk)).reshape(B, Sq, Sk)
    return jnp.where(m, 0.0, -1e9).astype(jnp.float32)


def embed(ids, table, pe, d_model):
    # TODO(synk): embedding gather kept in plain JAX (no clean tiny-Pallas
    # equivalent at this scale).
    x = jnp.take(table, ids, axis=0) * math.sqrt(d_model)
    S = ids.shape[1]
    return x + pe[:S][None]


def transformer_forward(params, inp, target, num_head, enc_mask=None,
                        dec_target_mask=None, dec_src_mask=None,
                        dec_causal=True):
    d_model = params["enc_emb"].shape[1]
    B, S = inp.shape
    St = target.shape[1]

    enc_add = _prep_mask(enc_mask, B, S, S)
    tgt_add = _prep_mask(dec_target_mask, B, St, St)
    src_add = _prep_mask(dec_src_mask, B, St, S)
    # If no explicit target mask is given, generate the causal mask in-kernel.
    tgt_causal = dec_causal and (dec_target_mask is None)

    # Encoder.
    x = embed(inp, params["enc_emb"], params["pe"], d_model)
    for lp in params["enc_layers"]:
        x = encoder_layer(x, lp, enc_add, num_head)
    enc_out = x

    # Decoder.
    y = embed(target, params["dec_emb"], params["pe"], d_model)
    for lp in params["dec_layers"]:
        y = decoder_layer(y, enc_out, lp, tgt_add, src_add, num_head,
                          tgt_causal)

    # Final vocab projection fused with (exact) softmax.
    probs = linear_softmax(y.reshape(B * St, d_model),
                           params["out_proj"]["w"], params["out_proj"]["b"])
    return probs.reshape(B, St, -1)


# ----------------------------------------------------------------------------
# Main
# ----------------------------------------------------------------------------

if __name__ == "__main__":
    B, S = 2, 8
    INPUT_VOCAB, TARGET_VOCAB = 32, 32
    EMB_DIM, MAX_SEQ, NUM_LAYERS, NUM_HEAD, FFN_HIDDEN = 32, 16, 2, 4, 64

    root = jax.random.PRNGKey(0)
    k_params, k_inp, k_tgt = jax.random.split(root, 3)

    params = init_transformer_params(
        k_params, INPUT_VOCAB, TARGET_VOCAB, EMB_DIM, MAX_SEQ, NUM_LAYERS,
        FFN_HIDDEN)

    inp = jax.random.randint(k_inp, (B, S), 0, INPUT_VOCAB)
    target = jax.random.randint(k_tgt, (B, S), 0, TARGET_VOCAB)

    # Decoder self-attention causal mask is generated inside the kernel
    # (dec_causal=True); no mask tensor is materialized in HBM.
    out = transformer_forward(params, inp, target, NUM_HEAD,
                              enc_mask=None,
                              dec_target_mask=None,
                              dec_src_mask=None,
                              dec_causal=True)
    out = jax.block_until_ready(out)

    assert out.shape == (B, S, TARGET_VOCAB), out.shape
    # Exact softmax normalization: rows sum to ~1 at f32 precision.
    assert jnp.allclose(jnp.sum(out, axis=-1), 1.0, atol=1e-4)
    assert bool(jnp.all(jnp.isfinite(out)))
    print("KERNEL_OK")
</pallas_src>

<mosaic_0001>
module attributes {stable_mosaic.version = 11 : i64} {
  func.func @_encoder_layer_kernel(%arg0: i32, %arg1: memref<1x8x32xf32, #tpu.memory_space<vmem>>, %arg2: memref<32x96xbf16, #tpu.memory_space<vmem>>, %arg3: memref<1x96xf32, #tpu.memory_space<vmem>>, %arg4: memref<32x32xbf16, #tpu.memory_space<vmem>>, %arg5: memref<1x32xf32, #tpu.memory_space<vmem>>, %arg6: memref<1x32xf32, #tpu.memory_space<vmem>>, %arg7: memref<1x32xf32, #tpu.memory_space<vmem>>, %arg8: memref<32x64xbf16, #tpu.memory_space<vmem>>, %arg9: memref<1x64xf32, #tpu.memory_space<vmem>>, %arg10: memref<64x32xbf16, #tpu.memory_space<vmem>>, %arg11: memref<1x32xf32, #tpu.memory_space<vmem>>, %arg12: memref<1x32xf32, #tpu.memory_space<vmem>>, %arg13: memref<1x32xf32, #tpu.memory_space<vmem>>, %arg14: memref<1x8x32xf32, #tpu.memory_space<vmem>>) attributes {dimension_semantics = [#tpu.dimension_semantics<parallel>], iteration_bounds = array<i64: 2>, scalar_prefetch = 0 : i64, scratch_operands = 0 : i64, tpu.core_type = #tpu.core_type<tc>, window_params = [{transform_indices = @transform_0, window_bounds = array<i64: 1, 8, 32>}, {pipeline_mode = #tpu.pipeline_mode<synchronous>, transform_indices = @transform_1, window_bounds = array<i64: 32, 96>}, {pipeline_mode = #tpu.pipeline_mode<synchronous>, transform_indices = @transform_2, window_bounds = array<i64: 1, 96>}, {pipeline_mode = #tpu.pipeline_mode<synchronous>, transform_indices = @transform_3, window_bounds = array<i64: 32, 32>}, {pipeline_mode = #tpu.pipeline_mode<synchronous>, transform_indices = @transform_4, window_bounds = array<i64: 1, 32>}, {pipeline_mode = #tpu.pipeline_mode<synchronous>, transform_indices = @transform_5, window_bounds = array<i64: 1, 32>}, {pipeline_mode = #tpu.pipeline_mode<synchronous>, transform_indices = @transform_6, window_bounds = array<i64: 1, 32>}, {pipeline_mode = #tpu.pipeline_mode<synchronous>, transform_indices = @transform_7, window_bounds = array<i64: 32, 64>}, {pipeline_mode = #tpu.pipeline_mode<synchronous>, transform_indices = @transform_8, window_bounds = array<i64: 1, 64>}, {pipeline_mode = #tpu.pipeline_mode<synchronous>, transform_indices = @transform_9, window_bounds = array<i64: 64, 32>}, {pipeline_mode = #tpu.pipeline_mode<synchronous>, transform_indices = @transform_10, window_bounds = array<i64: 1, 32>}, {pipeline_mode = #tpu.pipeline_mode<synchronous>, transform_indices = @transform_11, window_bounds = array<i64: 1, 32>}, {pipeline_mode = #tpu.pipeline_mode<synchronous>, transform_indices = @transform_12, window_bounds = array<i64: 1, 32>}, {transform_indices = @transform_13, window_bounds = array<i64: 1, 8, 32>}]} {
    %c0 = arith.constant 0 : index
    %c0_0 = arith.constant 0 : index
    %c0_1 = arith.constant 0 : index
    %0 = vector.load %arg1[%c0, %c0_0, %c0_1] : memref<1x8x32xf32, #tpu.memory_space<vmem>>, vector<1x8x32xf32>
    %1 = vector.shape_cast %0 : vector<1x8x32xf32> to vector<8x32xf32>
    %2 = arith.truncf %1 : vector<8x32xf32> to vector<8x32xbf16>
    %c0_2 = arith.constant 0 : index
    %c0_3 = arith.constant 0 : index
    %3 = vector.load %arg2[%c0_2, %c0_3] : memref<32x96xbf16, #tpu.memory_space<vmem>>, vector<32x96xbf16>
    %cst = arith.constant dense<0.000000e+00> : vector<8x96xf32>
    %4 = tpu.matmul %2, %3, %cst {dimension_numbers = #tpu.dot_dimension_numbers<[1], [0], [0], [1], [0, 0, 1, 1], [], []>} : vector<8x32xbf16>, vector<32x96xbf16>, vector<8x96xf32> -> vector<8x96xf32>
    %c0_4 = arith.constant 0 : index
    %c0_5 = arith.constant 0 : index
    %5 = vector.load %arg3[%c0_4, %c0_5] : memref<1x96xf32, #tpu.memory_space<vmem>>, vector<1x96xf32>
    %6 = vector.broadcast %5 : vector<1x96xf32> to vector<8x96xf32>
    %7 = arith.addf %4, %6 : vector<8x96xf32>
    %8 = vector.extract_strided_slice %7 {offsets = [0, 0], sizes = [8, 32], strides = [1, 1]} : vector<8x96xf32> to vector<8x32xf32>
    %9 = vector.extract_strided_slice %7 {offsets = [0, 32], sizes = [8, 32], strides = [1, 1]} : vector<8x96xf32> to vector<8x32xf32>
    %10 = vector.extract_strided_slice %7 {offsets = [0, 64], sizes = [8, 32], strides = [1, 1]} : vector<8x96xf32> to vector<8x32xf32>
    %11 = vector.shape_cast %8 : vector<8x32xf32> to vector<8x4x8xf32>
    %12 = arith.truncf %11 : vector<8x4x8xf32> to vector<8x4x8xbf16>
    %13 = vector.shape_cast %9 : vector<8x32xf32> to vector<8x4x8xf32>
    %14 = arith.truncf %13 : vector<8x4x8xf32> to vector<8x4x8xbf16>
    %15 = vector.shape_cast %10 : vector<8x32xf32> to vector<8x4x8xf32>
    %16 = arith.truncf %15 : vector<8x4x8xf32> to vector<8x4x8xbf16>
    "tpu.trace_start"() <{level = 10 : i32, message = "qhd,khd->hqk"}> : () -> ()
    %cst_6 = arith.constant dense<0.000000e+00> : vector<4x8x8xf32>
    %17 = tpu.matmul %12, %14, %cst_6 {dimension_numbers = #tpu.dot_dimension_numbers<[2], [2], [0], [0], [0, 1, 0, 0, 1, 0], [1], [1]>} : vector<8x4x8xbf16>, vector<8x4x8xbf16>, vector<4x8x8xf32> -> vector<4x8x8xf32>
    "tpu.trace_stop"() : () -> ()
    %cst_7 = arith.constant 0.353553385 : f32
    %18 = vector.broadcast %cst_7 : f32 to vector<4x8x8xf32>
    %19 = arith.mulf %17, %18 : vector<4x8x8xf32>
    %cst_8 = arith.constant dense<0xFF800000> : vector<4x8xf32>
    %20 = vector.multi_reduction <maximumf>, %19, %cst_8 [2] : vector<4x8x8xf32> to vector<4x8xf32>
    %21 = vector.shape_cast %20 : vector<4x8xf32> to vector<4x8x1xf32>
    %22 = vector.broadcast %21 : vector<4x8x1xf32> to vector<4x8x8xf32>
    %23 = arith.subf %19, %22 : vector<4x8x8xf32>
    %24 = math.exp %23 : vector<4x8x8xf32>
    %cst_9 = arith.constant dense<0.000000e+00> : vector<4x8xf32>
    %25 = vector.multi_reduction <add>, %24, %cst_9 [2] : vector<4x8x8xf32> to vector<4x8xf32>
    %26 = vector.shape_cast %25 : vector<4x8xf32> to vector<4x8x1xf32>
    %27 = tpu.reciprocal %26 {approx = true} : vector<4x8x1xf32> -> vector<4x8x1xf32>
    %28 = vector.broadcast %27 : vector<4x8x1xf32> to vector<4x8x8xf32>
    %29 = arith.mulf %24, %28 : vector<4x8x8xf32>
    %30 = arith.truncf %29 : vector<4x8x8xf32> to vector<4x8x8xbf16>
    "tpu.trace_start"() <{level = 10 : i32, message = "hqk,khd->qhd"}> : () -> ()
    %cst_10 = arith.constant dense<0.000000e+00> : vector<4x8x8xf32>
    %31 = tpu.matmul %16, %30, %cst_10 {dimension_numbers = #tpu.dot_dimension_numbers<[0], [2], [2], [1], [0, 1, 0, 2, 1, 1], [1], [0]>} : vector<8x4x8xbf16>, vector<4x8x8xbf16>, vector<4x8x8xf32> -> vector<4x8x8xf32>
    %32 = tpu.transpose %31, [2, 0, 1] : vector<4x8x8xf32> -> vector<8x4x8xf32>
    "tpu.trace_stop"() : () -> ()
    %33 = vector.shape_cast %32 : vector<8x4x8xf32> to vector<8x32xf32>
    %34 = arith.truncf %33 : vector<8x32xf32> to vector<8x32xbf16>
    %c0_11 = arith.constant 0 : index
    %c0_12 = arith.constant 0 : index
    %35 = vector.load %arg4[%c0_11, %c0_12] : memref<32x32xbf16, #tpu.memory_space<vmem>>, vector<32x32xbf16>
    %cst_13 = arith.constant dense<0.000000e+00> : vector<8x32xf32>
    %36 = tpu.matmul %34, %35, %cst_13 {dimension_numbers = #tpu.dot_dimension_numbers<[1], [0], [0], [1], [0, 0, 1, 1], [], []>} : vector<8x32xbf16>, vector<32x32xbf16>, vector<8x32xf32> -> vector<8x32xf32>
    %c0_14 = arith.constant 0 : index
    %c0_15 = arith.constant 0 : index
    %37 = vector.load %arg5[%c0_14, %c0_15] : memref<1x32xf32, #tpu.memory_space<vmem>>, vector<1x32xf32>
    %38 = vector.broadcast %37 : vector<1x32xf32> to vector<8x32xf32>
    %39 = arith.addf %36, %38 : vector<8x32xf32>
    %40 = arith.addf %1, %39 : vector<8x32xf32>
    %c0_16 = arith.constant 0 : index
    %c0_17 = arith.constant 0 : index
    %41 = vector.load %arg6[%c0_16, %c0_17] : memref<1x32xf32, #tpu.memory_space<vmem>>, vector<1x32xf32>
    %c0_18 = arith.constant 0 : index
    %c0_19 = arith.constant 0 : index
    %42 = vector.load %arg7[%c0_18, %c0_19] : memref<1x32xf32, #tpu.memory_space<vmem>>, vector<1x32xf32>
    %cst_20 = arith.constant dense<0.000000e+00> : vector<8xf32>
    %43 = vector.multi_reduction <add>, %40, %cst_20 [1] : vector<8x32xf32> to vector<8xf32>
    %44 = vector.shape_cast %43 : vector<8xf32> to vector<8x1xf32>
    %cst_21 = arith.constant 3.200000e+01 : f32
    %45 = vector.broadcast %cst_21 : f32 to vector<8x1xf32>
    %46 = arith.divf %44, %45 : vector<8x1xf32>
    %47 = vector.broadcast %46 : vector<8x1xf32> to vector<8x32xf32>
    %48 = arith.subf %40, %47 : vector<8x32xf32>
    %49 = arith.mulf %48, %48 : vector<8x32xf32>
    %cst_22 = arith.constant dense<0.000000e+00> : vector<8xf32>
    %50 = vector.multi_reduction <add>, %49, %cst_22 [1] : vector<8x32xf32> to vector<8xf32>
    %51 = vector.shape_cast %50 : vector<8xf32> to vector<8x1xf32>
    %cst_23 = arith.constant 3.200000e+01 : f32
    %52 = vector.broadcast %cst_23 : f32 to vector<8x1xf32>
    %53 = arith.divf %51, %52 : vector<8x1xf32>
    %cst_24 = arith.constant 9.99999974E-6 : f32
    %54 = vector.broadcast %cst_24 : f32 to vector<8x1xf32>
    %55 = arith.addf %53, %54 : vector<8x1xf32>
    %56 = math.rsqrt %55 : vector<8x1xf32>
    %57 = vector.broadcast %56 : vector<8x1xf32> to vector<8x32xf32>
    %58 = arith.mulf %48, %57 : vector<8x32xf32>
    %59 = vector.broadcast %41 : vector<1x32xf32> to vector<8x32xf32>
    %60 = arith.mulf %58, %59 : vector<8x32xf32>
    %61 = vector.broadcast %42 : vector<1x32xf32> to vector<8x32xf32>
    %62 = arith.addf %60, %61 : vector<8x32xf32>
    %63 = arith.truncf %62 : vector<8x32xf32> to vector<8x32xbf16>
    %c0_25 = arith.constant 0 : index
    %c0_26 = arith.constant 0 : index
    %64 = vector.load %arg8[%c0_25, %c0_26] : memref<32x64xbf16, #tpu.memory_space<vmem>>, vector<32x64xbf16>
    %cst_27 = arith.constant dense<0.000000e+00> : vector<8x64xf32>
    %65 = tpu.matmul %63, %64, %cst_27 {dimension_numbers = #tpu.dot_dimension_numbers<[1], [0], [0], [1], [0, 0, 1, 1], [], []>} : vector<8x32xbf16>, vector<32x64xbf16>, vector<8x64xf32> -> vector<8x64xf32>
    %c0_28 = arith.constant 0 : index
    %c0_29 = arith.constant 0 : index
    %66 = vector.load %arg9[%c0_28, %c0_29] : memref<1x64xf32, #tpu.memory_space<vmem>>, vector<1x64xf32>
    %67 = vector.broadcast %66 : vector<1x64xf32> to vector<8x64xf32>
    %68 = arith.addf %65, %67 : vector<8x64xf32>
    %cst_30 = arith.constant 0.000000e+00 : f32
    %69 = vector.broadcast %cst_30 : f32 to vector<8x64xf32>
    %70 = arith.maximumf %68, %69 : vector<8x64xf32>
    %71 = arith.truncf %70 : vector<8x64xf32> to vector<8x64xbf16>
    %c0_31 = arith.constant 0 : index
    %c0_32 = arith.constant 0 : index
    %72 = vector.load %arg10[%c0_31, %c0_32] : memref<64x32xbf16, #tpu.memory_space<vmem>>, vector<64x32xbf16>
    %cst_33 = arith.constant dense<0.000000e+00> : vector<8x32xf32>
    %73 = tpu.matmul %71, %72, %cst_33 {dimension_numbers = #tpu.dot_dimension_numbers<[1], [0], [0], [1], [0, 0, 1, 1], [], []>} : vector<8x64xbf16>, vector<64x32xbf16>, vector<8x32xf32> -> vector<8x32xf32>
    %c0_34 = arith.constant 0 : index
    %c0_35 = arith.constant 0 : index
    %74 = vector.load %arg11[%c0_34, %c0_35] : memref<1x32xf32, #tpu.memory_space<vmem>>, vector<1x32xf32>
    %75 = vector.broadcast %74 : vector<1x32xf32> to vector<8x32xf32>
    %76 = arith.addf %73, %75 : vector<8x32xf32>
    %77 = arith.addf %62, %76 : vector<8x32xf32>
    %c0_36 = arith.constant 0 : index
    %c0_37 = arith.constant 0 : index
    %78 = vector.load %arg12[%c0_36, %c0_37] : memref<1x32xf32, #tpu.memory_space<vmem>>, vector<1x32xf32>
    %c0_38 = arith.constant 0 : index
    %c0_39 = arith.constant 0 : index
    %79 = vector.load %arg13[%c0_38, %c0_39] : memref<1x32xf32, #tpu.memory_space<vmem>>, vector<1x32xf32>
    %cst_40 = arith.constant dense<0.000000e+00> : vector<8xf32>
    %80 = vector.multi_reduction <add>, %77, %cst_40 [1] : vector<8x32xf32> to vector<8xf32>
    %81 = vector.shape_cast %80 : vector<8xf32> to vector<8x1xf32>
    %cst_41 = arith.constant 3.200000e+01 : f32
    %82 = vector.broadcast %cst_41 : f32 to vector<8x1xf32>
    %83 = arith.divf %81, %82 : vector<8x1xf32>
    %84 = vector.broadcast %83 : vector<8x1xf32> to vector<8x32xf32>
    %85 = arith.subf %77, %84 : vector<8x32xf32>
    %86 = arith.mulf %85, %85 : vector<8x32xf32>
    %cst_42 = arith.constant dense<0.000000e+00> : vector<8xf32>
    %87 = vector.multi_reduction <add>, %86, %cst_42 [1] : vector<8x32xf32> to vector<8xf32>
    %88 = vector.shape_cast %87 : vector<8xf32> to vector<8x1xf32>
    %cst_43 = arith.constant 3.200000e+01 : f32
    %89 = vector.broadcast %cst_43 : f32 to vector<8x1xf32>
    %90 = arith.divf %88, %89 : vector<8x1xf32>
    %cst_44 = arith.constant 9.99999974E-6 : f32
    %91 = vector.broadcast %cst_44 : f32 to vector<8x1xf32>
    %92 = arith.addf %90, %91 : vector<8x1xf32>
    %93 = math.rsqrt %92 : vector<8x1xf32>
    %94 = vector.broadcast %93 : vector<8x1xf32> to vector<8x32xf32>
    %95 = arith.mulf %85, %94 : vector<8x32xf32>
    %96 = vector.broadcast %78 : vector<1x32xf32> to vector<8x32xf32>
    %97 = arith.mulf %95, %96 : vector<8x32xf32>
    %98 = vector.broadcast %79 : vector<1x32xf32> to vector<8x32xf32>
    %99 = arith.addf %97, %98 : vector<8x32xf32>
    %c0_45 = arith.constant 0 : index
    %c0_46 = arith.constant 0 : index
    %c0_47 = arith.constant 0 : index
    %100 = vector.load %arg14[%c0_45, %c0_46, %c0_47] : memref<1x8x32xf32, #tpu.memory_space<vmem>>, vector<1x8x32xf32>
    %101 = vector.shape_cast %100 : vector<1x8x32xf32> to vector<8x32xf32>
    %102 = vector.shape_cast %99 : vector<8x32xf32> to vector<1x8x32xf32>
    tpu.vector_store %arg14[%c0_45, %c0_46, %c0_47], %102 {strides = array<i32>} : memref<1x8x32xf32, #tpu.memory_space<vmem>>, vector<1x8x32xf32>,
    return
  }
  func.func @transform_0(%arg0: i32) -> (i32, i32, i32) {
    %c0_i32 = arith.constant 0 : i32
    %c0_i32_0 = arith.constant 0 : i32
    %c0_i32_1 = arith.constant 0 : i32
    return %arg0, %c0_i32, %c0_i32_0 : i32, i32, i32
  }
  func.func @transform_1(%arg0: i32) -> (i32, i32) {
    %c0_i32 = arith.constant 0 : i32
    %c0_i32_0 = arith.constant 0 : i32
    %c0_i32_1 = arith.constant 0 : i32
    return %c0_i32, %c0_i32_0 : i32, i32
  }
  func.func @transform_2(%arg0: i32) -> (i32, i32) {
    %c0_i32 = arith.constant 0 : i32
    %c0_i32_0 = arith.constant 0 : i32
    %c0_i32_1 = arith.constant 0 : i32
    return %c0_i32, %c0_i32_0 : i32, i32
  }
  func.func @transform_3(%arg0: i32) -> (i32, i32) {
    %c0_i32 = arith.constant 0 : i32
    %c0_i32_0 = arith.constant 0 : i32
    %c0_i32_1 = arith.constant 0 : i32
    return %c0_i32, %c0_i32_0 : i32, i32
  }
  func.func @transform_4(%arg0: i32) -> (i32, i32) {
    %c0_i32 = arith.constant 0 : i32
    %c0_i32_0 = arith.constant 0 : i32
    %c0_i32_1 = arith.constant 0 : i32
    return %c0_i32, %c0_i32_0 : i32, i32
  }
  func.func @transform_5(%arg0: i32) -> (i32, i32) {
    %c0_i32 = arith.constant 0 : i32
    %c0_i32_0 = arith.constant 0 : i32
    %c0_i32_1 = arith.constant 0 : i32
    return %c0_i32, %c0_i32_0 : i32, i32
  }
  func.func @transform_6(%arg0: i32) -> (i32, i32) {
    %c0_i32 = arith.constant 0 : i32
    %c0_i32_0 = arith.constant 0 : i32
    %c0_i32_1 = arith.constant 0 : i32
    return %c0_i32, %c0_i32_0 : i32, i32
  }
  func.func @transform_7(%arg0: i32) -> (i32, i32) {
    %c0_i32 = arith.constant 0 : i32
    %c0_i32_0 = arith.constant 0 : i32
    %c0_i32_1 = arith.constant 0 : i32
    return %c0_i32, %c0_i32_0 : i32, i32
  }
  func.func @transform_8(%arg0: i32) -> (i32, i32) {
    %c0_i32 = arith.constant 0 : i32
    %c0_i32_0 = arith.constant 0 : i32
    %c0_i32_1 = arith.constant 0 : i32
    return %c0_i32, %c0_i32_0 : i32, i32
  }
  func.func @transform_9(%arg0: i32) -> (i32, i32) {
    %c0_i32 = arith.constant 0 : i32
    %c0_i32_0 = arith.constant 0 : i32
    %c0_i32_1 = arith.constant 0 : i32
    return %c0_i32, %c0_i32_0 : i32, i32
  }
  func.func @transform_10(%arg0: i32) -> (i32, i32) {
    %c0_i32 = arith.constant 0 : i32
    %c0_i32_0 = arith.constant 0 : i32
    %c0_i32_1 = arith.constant 0 : i32
    return %c0_i32, %c0_i32_0 : i32, i32
  }
  func.func @transform_11(%arg0: i32) -> (i32, i32) {
    %c0_i32 = arith.constant 0 : i32
    %c0_i32_0 = arith.constant 0 : i32
    %c0_i32_1 = arith.constant 0 : i32
    return %c0_i32, %c0_i32_0 : i32, i32
  }
  func.func @transform_12(%arg0: i32) -> (i32, i32) {
    %c0_i32 = arith.constant 0 : i32
    %c0_i32_0 = arith.constant 0 : i32
    %c0_i32_1 = arith.constant 0 : i32
    return %c0_i32, %c0_i32_0 : i32, i32
  }
  func.func @transform_13(%arg0: i32) -> (i32, i32, i32) {
    %c0_i32 = arith.constant 0 : i32
    %c0_i32_0 = arith.constant 0 : i32
    %c0_i32_1 = arith.constant 0 : i32
    return %arg0, %c0_i32, %c0_i32_0 : i32, i32, i32
  }
}

</mosaic_0001>

<llo_original>
// kernel: tpu_custom_call.1
$region0: #{tpu_custom_call.1}
  #allocation0 [shape = 'u32[]', space=smem, size = 0x4, offset = 0x4, fixed_abs, tag = 'smem constant byte address 0x4 - core index']
  #allocation1 [shape = 'u32[144,128]{1,0:T(1,128)}', space=vmem, size = 0x12000, scoped, tag = 'internal scratch']
  %s0 = inlined_call_operand.vmem [shape: f32[2,8,32], index: 0, kind: input, shape index: {}]
  %s1 = inlined_call_operand.vmem [shape: bf16[32,96], index: 1, kind: input, shape index: {}]
  %s2 = inlined_call_operand.hbm [shape: f32[1,96], index: 2, kind: input, shape index: {}]
  %s3 = inlined_call_operand.vmem [shape: bf16[32,32], index: 3, kind: input, shape index: {}]
  %s4 = inlined_call_operand.hbm [shape: f32[1,32], index: 4, kind: input, shape index: {}]
  %s5 = inlined_call_operand.hbm [shape: f32[1,32], index: 5, kind: input, shape index: {}]
  %s6 = inlined_call_operand.hbm [shape: f32[1,32], index: 6, kind: input, shape index: {}]
  %s7 = inlined_call_operand.hbm [shape: bf16[32,64], index: 7, kind: input, shape index: {}]
  %s8 = inlined_call_operand.hbm [shape: f32[1,64], index: 8, kind: input, shape index: {}]
  %s9 = inlined_call_operand.vmem [shape: bf16[64,32], index: 9, kind: input, shape index: {}]
  %s10 = inlined_call_operand.vmem [shape: f32[1,32], index: 10, kind: input, shape index: {}]
  %s11 = inlined_call_operand.vmem [shape: f32[1,32], index: 11, kind: input, shape index: {}]
  %s12 = inlined_call_operand.vmem [shape: f32[1,32], index: 12, kind: input, shape index: {}]
  %s13 = inlined_call_operand.hbm [shape: f32[2,8,32], index: 13, kind: output, shape index: {}]
  %s14 = sld [smem:[#allocation0]]
  $region109: #{tpu_custom_call.1} parent=0
    _
  %s16 = ssub.s32 1, %s14
  %s17 = scalar_select 0, %s16, %s14
  $region1: #{tpu_custom_call.1} parent=0
    #allocation2 [shape = 'u8[512]{0}', space=vmem, size = 0x400, scoped, tag = 'input window, operand 2, single buffered']
    #allocation3 [shape = 's32[2]{0}', space=sflag, size = 0x8, scoped, tag = 'scoped memory for tpu_custom_call.1']
    #allocation4 [shape = 's32[2]{0}', space=sflag, size = 0x8, scoped, tag = 'scoped memory for tpu_custom_call.1']
    #allocation5 [shape = 'u8[512]{0}', space=vmem, size = 0x400, scoped, tag = 'input window, operand 4, single buffered']
    #allocation6 [shape = 's32[1]{0}', space=sflag, size = 0x4, scoped, tag = 'scoped memory for tpu_custom_call.1']
    #allocation7 [shape = 'u8[512]{0}', space=vmem, size = 0x400, scoped, tag = 'input window, operand 5, single buffered']
    #allocation8 [shape = 'u8[512]{0}', space=vmem, size = 0x400, scoped, tag = 'input window, operand 6, single buffered']
    #allocation9 [shape = 's32[1]{0}', space=sflag, size = 0x4, scoped, tag = 'scoped memory for tpu_custom_call.1']
    #allocation10 [shape = 'u8[8192]{0}', space=vmem, size = 0x2000, scoped, tag = 'input window, operand 7, single buffered']
    #allocation11 [shape = 'u8[512]{0}', space=vmem, size = 0x400, scoped, tag = 'input window, operand 8, single buffered']
    #allocation12 [shape = 's32[1]{0}', space=sflag, size = 0x4, scoped, tag = 'scoped memory for tpu_custom_call.1']
    #allocation13 [shape = 'u8[8192]{0}', space=vmem, size = 0x2000, scoped, tag = 'output window, operand 0']
    %18 = vsyncpa [#allocation3], 0
    %19 = vsyncpa [#allocation6], 0
    %20 = vsyncpa [#allocation9], 0
    %21 = vsyncpa [#allocation12], 0
    %22 = vsyncpa [#allocation4], 0
    %s23 = scalar_lea.sflag [#allocation4], 1
    %24 = vsyncpa %s23, 0
    loop: start=0, step=1, limit=4
    $region2: #{tpu_custom_call.1} parent=1 // loop_pre_header
      _
    $region3: #{tpu_custom_call.1} parent=1 // loop_header
      %s26 = sphi 0, %s30
      %p27 = scmp.ge.s32.totalorder %s26, 4
      %s36 = sphi 0, %s38
      %s39 = sphi 0, %s36
      %s40 = sphi 0, %s39
      %s56 = sphi 0, %s40
      %s60 = sphi 0, %s60
      %s62 = sphi 0, %s60
      %s63 = sphi 0, %s62
      %s77 = sphi 0, %s63
      %s81 = sphi 0, %s81
      %s83 = sphi 0, %s81
      %s84 = sphi 0, %s83
      %s98 = sphi 0, %s84
      %s102 = sphi 0, %s102
      %s104 = sphi 0, %s102
      %s105 = sphi 0, %s104
      %s119 = sphi 0, %s105
      %s123 = sphi 0, %s123
      %s125 = sphi 0, %s123
      %s126 = sphi 0, %s125
      %s140 = sphi 0, %s126
      %s144 = sphi 0, %s144
      %s146 = sphi 0, %s144
      %s147 = sphi 0, %s146
      %s161 = sphi 0, %s147
      %s165 = sphi 0, %s165
      %s167 = sphi 0, %s165
      %s168 = sphi 0, %s167
      %s182 = sphi 0, %s168
      %s186 = sphi 0, %s186
      %s188 = sphi 0, %s186
      %s189 = sphi 0, %s188
      %s203 = sphi 0, %s189
      %s207 = sphi 0, %s207
      %s209 = sphi 0, %s207
      %s210 = sphi 0, %s209
      %s224 = sphi 0, %s210
      %s228 = sphi 0, %s228
      %s230 = sphi 0, %s228
      %s231 = sphi 0, %s230
      %s245 = sphi 0, %s231
      %s249 = sphi 0, %s249
      %s251 = sphi 0, %s249
      %s252 = sphi 0, %s251
      %s266 = sphi 0, %s252
      %s270 = sphi 0, %s270
      %s272 = sphi 0, %s270
      %s273 = sphi 0, %s272
      %s287 = sphi 0, %s273
      %s291 = sphi 0, %s291
      %s293 = sphi 0, %s291
      %s294 = sphi 0, %s293
      %s308 = sphi 0, %s294
      %s314 = sphi 0, %s316
      %s317 = sphi 0, %s314
      %s318 = sphi 0, %s317
      %s334 = sphi 0, %s318
    $region4: #{tpu_custom_call.1} parent=1 // loop_header_branch
      %29 = sbr.rel (%p27) target = $region8
    $region5: #{tpu_custom_call.1} parent=1 // loop_body
      %s31 = ssub.s32 %s26, 1
      %s32 = ssub.s32 %s26, 2
      %s33 = sadd.s32 %s26, 1
      %s34 = ssub.s32 %s26, %s33
      %p35 = scmp.eq.s32.totalorder %s34, 0
      %s37 = sadd.s32 %s36, 1
      %s38 = scalar_select %p35, %s36, %s37
      %p41 = pneg %p35
      %p42 = scmp.eq.s32.totalorder %s26, 1
      %p43 = por %p41, %p42
      %p44 = scmp.ne.s32.totalorder %s36, %s39
      %p45 = scmp.eq.s32.totalorder %s26, 0
      %p46 = por %p44, %p45
      %p47 = scmp.ne.s32.totalorder %s36, %s39
      %p48 = scmp.eq.s32.totalorder %s31, 1
      %p49 = por %p47, %p48
      %p50 = scmp.ne.s32.totalorder %s39, %s40
      %p51 = scmp.eq.s32.totalorder %s31, 0
      %p52 = por %p50, %p51
      %p53 = scmp.ne.s32.totalorder %s39, %s40
      %p54 = scmp.eq.s32.totalorder %s32, 1
      %p55 = por %p53, %p54
      %p57 = scmp.ne.s32.totalorder %s40, %s56
      %p58 = scmp.eq.s32.totalorder %s32, 0
      %p59 = por %p57, %p58
      %s61 = sadd.s32 %s60, 1
      %p64 = scmp.eq.s32.totalorder %s26, 1
      %p65 = scmp.ne.s32.totalorder %s60, %s62
      %p66 = scmp.eq.s32.totalorder %s26, 0
      %p67 = por %p65, %p66
      %p68 = scmp.ne.s32.totalorder %s60, %s62
      %p69 = scmp.eq.s32.totalorder %s31, 1
      %p70 = por %p68, %p69
      %p71 = scmp.ne.s32.totalorder %s62, %s63
      %p72 = scmp.eq.s32.totalorder %s31, 0
      %p73 = por %p71, %p72
      %p74 = scmp.ne.s32.totalorder %s62, %s63
      %p75 = scmp.eq.s32.totalorder %s32, 1
      %p76 = por %p74, %p75
      %p78 = scmp.ne.s32.totalorder %s63, %s77
      %p79 = scmp.eq.s32.totalorder %s32, 0
      %p80 = por %p78, %p79
      %s82 = sadd.s32 %s81, 1
      %p85 = scmp.eq.s32.totalorder %s26, 1
      %p86 = scmp.ne.s32.totalorder %s81, %s83
      %p87 = scmp.eq.s32.totalorder %s26, 0
      %p88 = por %p86, %p87
      %p89 = scmp.ne.s32.totalorder %s81, %s83
      %p90 = scmp.eq.s32.totalorder %s31, 1
      %p91 = por %p89, %p90
      %p92 = scmp.ne.s32.totalorder %s83, %s84
      %p93 = scmp.eq.s32.totalorder %s31, 0
      %p94 = por %p92, %p93
      %p95 = scmp.ne.s32.totalorder %s83, %s84
      %p96 = scmp.eq.s32.totalorder %s32, 1
      %p97 = por %p95, %p96
      %p99 = scmp.ne.s32.totalorder %s84, %s98
      %p100 = scmp.eq.s32.totalorder %s32, 0
      %p101 = por %p99, %p100
      %s103 = sadd.s32 %s102, 1
      %p106 = scmp.eq.s32.totalorder %s26, 1
      %p107 = scmp.ne.s32.totalorder %s102, %s104
      %p108 = scmp.eq.s32.totalorder %s26, 0
      %p109 = por %p107, %p108
      %p110 = scmp.ne.s32.totalorder %s102, %s104
      %p111 = scmp.eq.s32.totalorder %s31, 1
      %p112 = por %p110, %p111
      %p113 = scmp.ne.s32.totalorder %s104, %s105
      %p114 = scmp.eq.s32.totalorder %s31, 0
      %p115 = por %p113, %p114
      %p116 = scmp.ne.s32.totalorder %s104, %s105
      %p117 = scmp.eq.s32.totalorder %s32, 1
      %p118 = por %p116, %p117
      %p120 = scmp.ne.s32.totalorder %s105, %s119
      %p121 = scmp.eq.s32.totalorder %s32, 0
      %p122 = por %p120, %p121
      %s124 = sadd.s32 %s123, 1
      %p127 = scmp.eq.s32.totalorder %s26, 1
      %p128 = scmp.ne.s32.totalorder %s123, %s125
      %p129 = scmp.eq.s32.totalorder %s26, 0
      %p130 = por %p128, %p129
      %p131 = scmp.ne.s32.totalorder %s123, %s125
      %p132 = scmp.eq.s32.totalorder %s31, 1
      %p133 = por %p131, %p132
      %p134 = scmp.ne.s32.totalorder %s125, %s126
      %p135 = scmp.eq.s32.totalorder %s31, 0
      %p136 = por %p134, %p135
      %p137 = scmp.ne.s32.totalorder %s125, %s126
      %p138 = scmp.eq.s32.totalorder %s32, 1
      %p139 = por %p137, %p138
      %p141 = scmp.ne.s32.totalorder %s126, %s140
      %p142 = scmp.eq.s32.totalorder %s32, 0
      %p143 = por %p141, %p142
      %s145 = sadd.s32 %s144, 1
      %p148 = scmp.eq.s32.totalorder %s26, 1
      %p149 = scmp.ne.s32.totalorder %s144, %s146
      %p150 = scmp.eq.s32.totalorder %s26, 0
      %p151 = por %p149, %p150
      %p152 = scmp.ne.s32.totalorder %s144, %s146
      %p153 = scmp.eq.s32.totalorder %s31, 1
      %p154 = por %p152, %p153
      %p155 = scmp.ne.s32.totalorder %s146, %s147
      %p156 = scmp.eq.s32.totalorder %s31, 0
      %p157 = por %p155, %p156
      %p158 = scmp.ne.s32.totalorder %s146, %s147
      %p159 = scmp.eq.s32.totalorder %s32, 1
      %p160 = por %p158, %p159
      %p162 = scmp.ne.s32.totalorder %s147, %s161
      %p163 = scmp.eq.s32.totalorder %s32, 0
      %p164 = por %p162, %p163
      %s166 = sadd.s32 %s165, 1
      %p169 = scmp.eq.s32.totalorder %s26, 1
      %p170 = scmp.ne.s32.totalorder %s165, %s167
      %p171 = scmp.eq.s32.totalorder %s26, 0
      %p172 = por %p170, %p171
      %p173 = scmp.ne.s32.totalorder %s165, %s167
      %p174 = scmp.eq.s32.totalorder %s31, 1
      %p175 = por %p173, %p174
      %p176 = scmp.ne.s32.totalorder %s167, %s168
      %p177 = scmp.eq.s32.totalorder %s31, 0
      %p178 = por %p176, %p177
      %p179 = scmp.ne.s32.totalorder %s167, %s168
      %p180 = scmp.eq.s32.totalorder %s32, 1
      %p181 = por %p179, %p180
      %p183 = scmp.ne.s32.totalorder %s168, %s182
      %p184 = scmp.eq.s32.totalorder %s32, 0
      %p185 = por %p183, %p184
      %s187 = sadd.s32 %s186, 1
      %p190 = scmp.eq.s32.totalorder %s26, 1
      %p191 = scmp.ne.s32.totalorder %s186, %s188
      %p192 = scmp.eq.s32.totalorder %s26, 0
      %p193 = por %p191, %p192
      %p194 = scmp.ne.s32.totalorder %s186, %s188
      %p195 = scmp.eq.s32.totalorder %s31, 1
      %p196 = por %p194, %p195
      %p197 = scmp.ne.s32.totalorder %s188, %s189
      %p198 = scmp.eq.s32.totalorder %s31, 0
      %p199 = por %p197, %p198
      %p200 = scmp.ne.s32.totalorder %s188, %s189
      %p201 = scmp.eq.s32.totalorder %s32, 1
      %p202 = por %p200, %p201
      %p204 = scmp.ne.s32.totalorder %s189, %s203
      %p205 = scmp.eq.s32.totalorder %s32, 0
      %p206 = por %p204, %p205
      %s208 = sadd.s32 %s207, 1
      %p211 = scmp.eq.s32.totalorder %s26, 1
      %p212 = scmp.ne.s32.totalorder %s207, %s209
      %p213 = scmp.eq.s32.totalorder %s26, 0
      %p214 = por %p212, %p213
      %p215 = scmp.ne.s32.totalorder %s207, %s209
      %p216 = scmp.eq.s32.totalorder %s31, 1
      %p217 = por %p215, %p216
      %p218 = scmp.ne.s32.totalorder %s209, %s210
      %p219 = scmp.eq.s32.totalorder %s31, 0
      %p220 = por %p218, %p219
      %p221 = scmp.ne.s32.totalorder %s209, %s210
      %p222 = scmp.eq.s32.totalorder %s32, 1
      %p223 = por %p221, %p222
      %p225 = scmp.ne.s32.totalorder %s210, %s224
      %p226 = scmp.eq.s32.totalorder %s32, 0
      %p227 = por %p225, %p226
      %s229 = sadd.s32 %s228, 1
      %p232 = scmp.eq.s32.totalorder %s26, 1
      %p233 = scmp.ne.s32.totalorder %s228, %s230
      %p234 = scmp.eq.s32.totalorder %s26, 0
      %p235 = por %p233, %p234
      %p236 = scmp.ne.s32.totalorder %s228, %s230
      %p237 = scmp.eq.s32.totalorder %s31, 1
      %p238 = por %p236, %p237
      %p239 = scmp.ne.s32.totalorder %s230, %s231
      %p240 = scmp.eq.s32.totalorder %s31, 0
      %p241 = por %p239, %p240
      %p242 = scmp.ne.s32.totalorder %s230, %s231
      %p243 = scmp.eq.s32.totalorder %s32, 1
      %p244 = por %p242, %p243
      %p246 = scmp.ne.s32.totalorder %s231, %s245
      %p247 = scmp.eq.s32.totalorder %s32, 0
      %p248 = por %p246, %p247
      %s250 = sadd.s32 %s249, 1
      %p253 = scmp.eq.s32.totalorder %s26, 1
      %p254 = scmp.ne.s32.totalorder %s249, %s251
      %p255 = scmp.eq.s32.totalorder %s26, 0
      %p256 = por %p254, %p255
      %p257 = scmp.ne.s32.totalorder %s249, %s251
      %p258 = scmp.eq.s32.totalorder %s31, 1
      %p259 = por %p257, %p258
      %p260 = scmp.ne.s32.totalorder %s251, %s252
      %p261 = scmp.eq.s32.totalorder %s31, 0
      %p262 = por %p260, %p261
      %p263 = scmp.ne.s32.totalorder %s251, %s252
      %p264 = scmp.eq.s32.totalorder %s32, 1
      %p265 = por %p263, %p264
      %p267 = scmp.ne.s32.totalorder %s252, %s266
      %p268 = scmp.eq.s32.totalorder %s32, 0
      %p269 = por %p267, %p268
      %s271 = sadd.s32 %s270, 1
      %p274 = scmp.eq.s32.totalorder %s26, 1
      %p275 = scmp.ne.s32.totalorder %s270, %s272
      %p276 = scmp.eq.s32.totalorder %s26, 0
      %p277 = por %p275, %p276
      %p278 = scmp.ne.s32.totalorder %s270, %s272
      %p279 = scmp.eq.s32.totalorder %s31, 1
      %p280 = por %p278, %p279
      %p281 = scmp.ne.s32.totalorder %s272, %s273
      %p282 = scmp.eq.s32.totalorder %s31, 0
      %p283 = por %p281, %p282
      %p284 = scmp.ne.s32.totalorder %s272, %s273
      %p285 = scmp.eq.s32.totalorder %s32, 1
      %p286 = por %p284, %p285
      %p288 = scmp.ne.s32.totalorder %s273, %s287
      %p289 = scmp.eq.s32.totalorder %s32, 0
      %p290 = por %p288, %p289
      %s292 = sadd.s32 %s291, 1
      %p295 = scmp.eq.s32.totalorder %s26, 1
      %p296 = scmp.ne.s32.totalorder %s291, %s293
      %p297 = scmp.eq.s32.totalorder %s26, 0
      %p298 = por %p296, %p297
      %p299 = scmp.ne.s32.totalorder %s291, %s293
      %p300 = scmp.eq.s32.totalorder %s31, 1
      %p301 = por %p299, %p300
      %p302 = scmp.ne.s32.totalorder %s293, %s294
      %p303 = scmp.eq.s32.totalorder %s31, 0
      %p304 = por %p302, %p303
      %p305 = scmp.ne.s32.totalorder %s293, %s294
      %p306 = scmp.eq.s32.totalorder %s32, 1
      %p307 = por %p305, %p306
      %p309 = scmp.ne.s32.totalorder %s294, %s308
      %p310 = scmp.eq.s32.totalorder %s32, 0
      %p311 = por %p309, %p310
      %s312 = ssub.s32 %s26, %s33
      %p313 = scmp.eq.s32.totalorder %s312, 0
      %s315 = sadd.s32 %s314, 1
      %s316 = scalar_select %p313, %s314, %s315
      %p319 = pneg %p313
      %p320 = scmp.eq.s32.totalorder %s26, 1
      %p321 = por %p319, %p320
      %p322 = scmp.ne.s32.totalorder %s314, %s317
      %p323 = scmp.eq.s32.totalorder %s26, 0
      %p324 = por %p322, %p323
      %p325 = scmp.ne.s32.totalorder %s314, %s317
      %p326 = scmp.eq.s32.totalorder %s31, 1
      %p327 = por %p325, %p326
      %p328 = scmp.ne.s32.totalorder %s317, %s318
      %p329 = scmp.eq.s32.totalorder %s31, 0
      %p330 = por %p328, %p329
      %p331 = scmp.ne.s32.totalorder %s317, %s318
      %p332 = scmp.eq.s32.totalorder %s32, 1
      %p333 = por %p331, %p332
      %p335 = scmp.ne.s32.totalorder %s318, %s334
      %p336 = scmp.eq.s32.totalorder %s32, 0
      %p337 = por %p335, %p336
      %p338 = scmp.le.s32.totalorder 1, %s26
      %p339 = scmp.lt.s32.totalorder %s26, 3
      %p340 = pnand %p338, %p339
      %p341 = pneg %p340
      // Predicated region
      $region9: #{tpu_custom_call.1} parent=5 // pred_check
        _
      $region10: #{tpu_custom_call.1} parent=5 // pred_check_branch
        %343 = sbr.rel (%p340) target = $region12
      $region11: #{tpu_custom_call.1} parent=5 // pred_region
        %s344 = ssub.s32 %s26, 1
        // Predicated region
        $region13: #{tpu_custom_call.1} parent=11 // pred_check
          %p345 = pneg %p73
        $region14: #{tpu_custom_call.1} parent=11 // pred_check_branch
          %347 = sbr.rel (%p345) target = $region16
        $region15: #{tpu_custom_call.1} parent=11 // pred_region
          _
        $region16: #{tpu_custom_call.1} parent=11 // pred_fallthru
          _
        // Predicated region
        $region17: #{tpu_custom_call.1} parent=11 // pred_check
          %p348 = pneg %p94
        $region18: #{tpu_custom_call.1} parent=11 // pred_check_branch
          %350 = sbr.rel (%p348) target = $region20
        $region19: #{tpu_custom_call.1} parent=11 // pred_region
          %s352 = ssub.s32 16, 16
          %353 = vsyncadd [#allocation3], %s352
          %s355 = sshll.u32 [#allocation2], 4
          %s356 = int_to_ptr.vmem [resolvable:$true] %s355
          %358 = dma.hbm_to_vmem [thread:$0]  %s2, 16, %s356, [#allocation3]
        $region20: #{tpu_custom_call.1} parent=11 // pred_fallthru
          _
        // Predicated region
        $region21: #{tpu_custom_call.1} parent=11 // pred_check
          %p359 = pneg %p115
        $region22: #{tpu_custom_call.1} parent=11 // pred_check_branch
          %361 = sbr.rel (%p359) target = $region24
        $region23: #{tpu_custom_call.1} parent=11 // pred_region
          _
        $region24: #{tpu_custom_call.1} parent=11 // pred_fallthru
          _
        // Predicated region
        $region25: #{tpu_custom_call.1} parent=11 // pred_check
          %p362 = pneg %p136
        $region26: #{tpu_custom_call.1} parent=11 // pred_check_branch
          %364 = sbr.rel (%p362) target = $region28
        $region27: #{tpu_custom_call.1} parent=11 // pred_region
          %s366 = ssub.s32 16, 16
          %367 = vsyncadd [#allocation6], %s366
          %s369 = sshll.u32 [#allocation5], 4
          %s370 = int_to_ptr.vmem [resolvable:$true] %s369
          %372 = dma.hbm_to_vmem [thread:$0]  %s4, 16, %s370, [#allocation6]
        $region28: #{tpu_custom_call.1} parent=11 // pred_fallthru
          _
        // Predicated region
        $region29: #{tpu_custom_call.1} parent=11 // pred_check
          %p373 = pneg %p157
        $region30: #{tpu_custom_call.1} parent=11 // pred_check_branch
          %375 = sbr.rel (%p373) target = $region32
        $region31: #{tpu_custom_call.1} parent=11 // pred_region
          %s377 = ssub.s32 16, 16
          %378 = vsyncadd [#allocation6], %s377
          %s380 = sshll.u32 [#allocation7], 4
          %s381 = int_to_ptr.vmem [resolvable:$true] %s380
          %383 = dma.hbm_to_vmem [thread:$0]  %s5, 16, %s381, [#allocation6]
        $region32: #{tpu_custom_call.1} parent=11 // pred_fallthru
          _
        // Predicated region
        $region33: #{tpu_custom_call.1} parent=11 // pred_check
          %p384 = pneg %p178
        $region34: #{tpu_custom_call.1} parent=11 // pred_check_branch
          %386 = sbr.rel (%p384) target = $region36
        $region35: #{tpu_custom_call.1} parent=11 // pred_region
          %s388 = ssub.s32 16, 16
          %389 = vsyncadd [#allocation9], %s388
          %s391 = sshll.u32 [#allocation8], 4
          %s392 = int_to_ptr.vmem [resolvable:$true] %s391
          %394 = dma.hbm_to_vmem [thread:$0]  %s6, 16, %s392, [#allocation9]
        $region36: #{tpu_custom_call.1} parent=11 // pred_fallthru
          _
        // Predicated region
        $region37: #{tpu_custom_call.1} parent=11 // pred_check
          %p395 = pneg %p199
        $region38: #{tpu_custom_call.1} parent=11 // pred_check_branch
          %397 = sbr.rel (%p395) target = $region40
        $region39: #{tpu_custom_call.1} parent=11 // pred_region
          %s399 = ssub.s32 256, 256
          %400 = vsyncadd [#allocation9], %s399
          %s401 = sshll.u32 [#allocation10], 4
          %s402 = int_to_ptr.vmem [resolvable:$true] %s401
          %407 = dma.hbm_to_vmem [thread:$0]  %s7, 256, %s402, [#allocation9], 64, 64, 4
        $region40: #{tpu_custom_call.1} parent=11 // pred_fallthru
          _
        // Predicated region
        $region41: #{tpu_custom_call.1} parent=11 // pred_check
          %p408 = pneg %p220
        $region42: #{tpu_custom_call.1} parent=11 // pred_check_branch
          %410 = sbr.rel (%p408) target = $region44
        $region43: #{tpu_custom_call.1} parent=11 // pred_region
          %s412 = ssub.s32 16, 16
          %413 = vsyncadd [#allocation12], %s412
          %s415 = sshll.u32 [#allocation11], 4
          %s416 = int_to_ptr.vmem [resolvable:$true] %s415
          %418 = dma.hbm_to_vmem [thread:$0]  %s8, 16, %s416, [#allocation12]
        $region44: #{tpu_custom_call.1} parent=11 // pred_fallthru
          _
        // Predicated region
        $region45: #{tpu_custom_call.1} parent=11 // pred_check
          %p419 = pneg %p241
        $region46: #{tpu_custom_call.1} parent=11 // pred_check_branch
          %421 = sbr.rel (%p419) target = $region48
        $region47: #{tpu_custom_call.1} parent=11 // pred_region
          _
        $region48: #{tpu_custom_call.1} parent=11 // pred_fallthru
          _
        // Predicated region
        $region49: #{tpu_custom_call.1} parent=11 // pred_check
          %p422 = pneg %p262
        $region50: #{tpu_custom_call.1} parent=11 // pred_check_branch
          %424 = sbr.rel (%p422) target = $region52
        $region51: #{tpu_custom_call.1} parent=11 // pred_region
          _
        $region52: #{tpu_custom_call.1} parent=11 // pred_fallthru
          _
        // Predicated region
        $region53: #{tpu_custom_call.1} parent=11 // pred_check
          %p425 = pneg %p283
        $region54: #{tpu_custom_call.1} parent=11 // pred_check_branch
          %427 = sbr.rel (%p425) target = $region56
        $region55: #{tpu_custom_call.1} parent=11 // pred_region
          _
        $region56: #{tpu_custom_call.1} parent=11 // pred_fallthru
          _
        // Predicated region
        $region57: #{tpu_custom_call.1} parent=11 // pred_check
          %p428 = pneg %p304
        $region58: #{tpu_custom_call.1} parent=11 // pred_check_branch
          %430 = sbr.rel (%p428) target = $region60
        $region59: #{tpu_custom_call.1} parent=11 // pred_region
          _
        $region60: #{tpu_custom_call.1} parent=11 // pred_fallthru
          _
      $region12: #{tpu_custom_call.1} parent=5 // pred_fallthru
        _
      %p431 = scmp.lt.s32.totalorder %s26, 2
      // Predicated region
      $region61: #{tpu_custom_call.1} parent=5 // pred_check
        %p432 = pneg %p431
      $region62: #{tpu_custom_call.1} parent=5 // pred_check_branch
        %434 = sbr.rel (%p432) target = $region64
      $region63: #{tpu_custom_call.1} parent=5 // pred_region
        // Predicated region
        $region65: #{tpu_custom_call.1} parent=63 // pred_check
          %p435 = pneg %p46
        $region66: #{tpu_custom_call.1} parent=63 // pred_check_branch
          %437 = sbr.rel (%p435) target = $region68
        $region67: #{tpu_custom_call.1} parent=63 // pred_region
          %p438 = scmp.lt.s32.totalorder %s26, 1
          %s439 = scalar_select %p438, %s26, 1
          %s440 = smul.addr %s439, 8
          %s441 = scalar_lea.vmem %s0, %s440
        $region68: #{tpu_custom_call.1} parent=63 // pred_fallthru
          _
      $region64: #{tpu_custom_call.1} parent=5 // pred_fallthru
        _
      %p442 = scmp.le.s32.totalorder 1, %s26
      %p443 = scmp.lt.s32.totalorder %s26, 3
      %p444 = pnand %p442, %p443
      %p445 = pneg %p444
      // Predicated region
      $region69: #{tpu_custom_call.1} parent=5 // pred_check
        _
      $region70: #{tpu_custom_call.1} parent=5 // pred_check_branch
        %447 = sbr.rel (%p444) target = $region72
      $region71: #{tpu_custom_call.1} parent=5 // pred_region
        %s448 = ssub.s32 %s26, 1
        // Predicated region
        $region73: #{tpu_custom_call.1} parent=71 // pred_check
          %p449 = pneg %p94
        $region74: #{tpu_custom_call.1} parent=71 // pred_check_branch
          %451 = sbr.rel (%p449) target = $region76
        $region75: #{tpu_custom_call.1} parent=71 // pred_region
          %452 = dma.done [#allocation3], 16
        $region76: #{tpu_custom_call.1} parent=71 // pred_fallthru
          _
        // Predicated region
        $region77: #{tpu_custom_call.1} parent=71 // pred_check
          %p453 = pneg %p136
        $region78: #{tpu_custom_call.1} parent=71 // pred_check_branch
          %455 = sbr.rel (%p453) target = $region80
        $region79: #{tpu_custom_call.1} parent=71 // pred_region
          %456 = dma.done [#allocation6], 16
        $region80: #{tpu_custom_call.1} parent=71 // pred_fallthru
          _
        // Predicated region
        $region81: #{tpu_custom_call.1} parent=71 // pred_check
          %p457 = pneg %p157
        $region82: #{tpu_custom_call.1} parent=71 // pred_check_branch
          %459 = sbr.rel (%p457) target = $region84
        $region83: #{tpu_custom_call.1} parent=71 // pred_region
          %460 = dma.done [#allocation6], 16
        $region84: #{tpu_custom_call.1} parent=71 // pred_fallthru
          _
        // Predicated region
        $region85: #{tpu_custom_call.1} parent=71 // pred_check
          %p461 = pneg %p178
        $region86: #{tpu_custom_call.1} parent=71 // pred_check_branch
          %463 = sbr.rel (%p461) target = $region88
        $region87: #{tpu_custom_call.1} parent=71 // pred_region
          %464 = dma.done [#allocation9], 16
        $region88: #{tpu_custom_call.1} parent=71 // pred_fallthru
          _
        // Predicated region
        $region89: #{tpu_custom_call.1} parent=71 // pred_check
          %p465 = pneg %p199
        $region90: #{tpu_custom_call.1} parent=71 // pred_check_branch
          %467 = sbr.rel (%p465) target = $region92
        $region91: #{tpu_custom_call.1} parent=71 // pred_region
          %468 = dma.done [#allocation9], 256
        $region92: #{tpu_custom_call.1} parent=71 // pred_fallthru
          _
        // Predicated region
        $region93: #{tpu_custom_call.1} parent=71 // pred_check
          %p469 = pneg %p220
        $region94: #{tpu_custom_call.1} parent=71 // pred_check_branch
          %471 = sbr.rel (%p469) target = $region96
        $region95: #{tpu_custom_call.1} parent=71 // pred_region
          %472 = dma.done [#allocation12], 16
        $region96: #{tpu_custom_call.1} parent=71 // pred_fallthru
          _
        %p473 = scmp.lt.s32.totalorder %s31, 1
        %s474 = scalar_select %p473, %s31, 1
        %s475 = smul.addr %s474, 8
        %s476 = scalar_lea.vmem %s0, %s475
        %p477 = pneg %p52
        %p478 = pneg %p49
        %p479 = pneg %p73
        %p480 = pneg %p70
        %p481 = pneg %p94
        %p482 = pneg %p91
        %p483 = pneg %p115
        %p484 = pneg %p112
        %p485 = pneg %p136
        %p486 = pneg %p133
        %p487 = pneg %p157
        %p488 = pneg %p154
        %p489 = pneg %p178
        %p490 = pneg %p175
        %p491 = pneg %p199
        %p492 = pneg %p196
        %p493 = pneg %p220
        %p494 = pneg %p217
        %p495 = pneg %p241
        %p496 = pneg %p238
        %p497 = pneg %p262
        %p498 = pneg %p259
        %p499 = pneg %p283
        %p500 = pneg %p280
        %p501 = pneg %p304
        %p502 = pneg %p301
        %p503 = pneg %p330
        %p504 = pneg %p327
        %s505 = sand.u32 %s317, 1
        %s506 = scalar_lea.sflag [#allocation4], %s505
        %s507 = sand.u32 %s317, 1
        %s508 = smul.addr %s507, 8
        %s509 = scalar_lea.vmem [#allocation13], %s508
        %p510 = scmp.lt.s32.totalorder %s31, 1
        %s511 = scalar_select %p510, %s31, 1
        %s512 = smul.addr %s511, 8
        %s513 = scalar_lea.vmem %s0, %s512
        %v515 = vld [vmem:[%s513] sm:$0xff]
        %v516 = vpack.c.bf16 %v515, %v515
        %v517 = vld [vmem:[%s1] sm:$0xf]
        %v518 = vld [vmem:[%s1 + $0x4] sm:$0xf]
        %v519 = vld [vmem:[%s1 + $0x8] sm:$0xf]
        %v520 = vld [vmem:[%s1 + $0xc] sm:$0xf]
        %v521 = vld [vmem:[#allocation2] sm:$0x1]
        %v523 = vlaneseq
        %v524 = vshrl.u32 %v523, 7
        %v525 = vsub.s32 0, %v524
        %v526 = vrot.slane %v521, %v525
        %v532 = vunpack.c.l.b16 %v517
        %v533 = vunpack.c.l.b16 %v518
        %v534 = vunpack.c.l.b16 %v519
        %v535 = vunpack.c.l.b16 %v520
        %v536 = vpack.c.b16 %v533, %v532
        %v537 = vpack.c.b16 %v535, %v534
        %vm540 = vcmask 261120
        %v542 = vsel %vm540, %v516, 0
        %544 = vmatprep.subr.bf16.mxu0 0
        %545 = vmatpush1.bf16.msra.mxu0 0
        %546 = vmatprep.subr.bf16.mxu0 0
        %547 = vmatpush1.bf16.msra.mxu0 0
        %548 = vmatprep.subr.bf16.mxu0 0
        %549 = vmatpush1.bf16.msra.mxu0 0
        %550 = vmatprep.subr.bf16.mxu0 0
        %551 = vmatpush1.bf16.msra.mxu0 0
        %552 = vmatprep.subr.bf16.mxu0 0
        %553 = vmatpush1.bf16.msra.mxu0 0
        %554 = vmatprep.subr.bf16.mxu0 0
        %555 = vmatpush1.bf16.msra.mxu0 0
        %556 = vmatprep.subr.bf16.mxu0 0
        %557 = vmatpush1.bf16.msra.mxu0 %v537
        %558 = vmatprep.subr.bf16.mxu0 0
        %559 = vmatpush1.bf16.msra.mxu0 %v536
        %560 = vmatprep.subr.bf16.mxu0 0
        %561 = vmatpush2.bf16.msra.mxu0 0
        %562 = vmatprep.subr.bf16.mxu0 0
        %563 = vmatpush2.bf16.msra.mxu0 0
        %564 = vmatprep.subr.bf16.mxu0 0
        %565 = vmatpush2.bf16.msra.mxu0 0
        %566 = vmatprep.subr.bf16.mxu0 0
        %567 = vmatpush2.bf16.msra.mxu0 0
        %568 = vmatprep.subr.bf16.mxu0 0
        %569 = vmatpush2.bf16.msra.mxu0 0
        %570 = vmatprep.subr.bf16.mxu0 0
        %571 = vmatpush2.bf16.msra.mxu0 0
        %572 = vmatprep.subr.bf16.mxu0 0
        %573 = vmatpush2.bf16.msra.mxu0 0
        %574 = vmatprep.subr.bf16.mxu0 0
        %575 = vmatpush2.bf16.msra.mxu0 0
        %576 = vmatprep.mubr.bf16.mxu0 0
        %577 = vmatmul.mubr.bf16.gmra.mxu0 %v542
        %v578 = vpop.f32.mrf.mxu0
        %v579 = vadd.f32 %v526, %v578
        %v580 = vpop.f32.mrf.mxu0
        %v581 = vpop.f32.mrf.mxu0
        %v582 = vpop.f32.mrf.mxu0
        %583 = vdwg.mxu0
        %585 = vrot.lane.b32.xlu0 %v579, 120
        %v586 = vpop.permute.xlu0 %585
        %588 = vrot.lane.b32.xlu0 %v579, 112
        %v589 = vpop.permute.xlu0 %588
        %591 = vrot.lane.b32.xlu0 %v579, 104
        %v592 = vpop.permute.xlu0 %591
        %v594 = vcombine.low %v579, %v589
        %v595 = vcombine.high %v579, %v589
        %v597 = vunpack.c.l.s4 1983009808
        %v598 = vunpack.c.0.s8 %v597
        %v599 = vlaneseq
        %v600 = vshrl.u32 %v599, 7
        %v601 = vsub.s32 %v598, %v600
        %v602 = vrot.slane %v594, %v601
        %v604 = vunpack.c.l.s4 1983009808
        %v605 = vunpack.c.0.s8 %v604
        %v606 = vlaneseq
        %v607 = vshrl.u32 %v606, 7
        %v608 = vsub.s32 %v605, %v607
        %v609 = vrot.slane %v595, %v608
        %v610 = vcombine.low %v586, %v592
        %v611 = vcombine.high %v586, %v592
        %v613 = vunpack.c.l.s4 1983009808
        %v614 = vunpack.c.0.s8 %v613
        %v615 = vlaneseq
        %v616 = vshrl.u32 %v615, 7
        %v617 = vsub.s32 %v614, %v616
        %v618 = vrot.slane %v610, %v617
        %v620 = vunpack.c.l.s4 1983009808
        %v621 = vunpack.c.0.s8 %v620
        %v622 = vlaneseq
        %v623 = vshrl.u32 %v622, 7
        %v624 = vsub.s32 %v621, %v623
        %v625 = vrot.slane %v611, %v624
        %v626 = vcombine.low %v602, %v618
        %v627 = vcombine.high %v602, %v618
        %v629 = vunpack.c.l.s4 1934713408
        %v630 = vunpack.c.0.s8 %v629
        %v631 = vlaneseq
        %v632 = vshrl.u32 %v631, 7
        %v633 = vsub.s32 %v630, %v632
        %v634 = vrot.slane %v626, %v633
        %v636 = vunpack.c.l.s4 1934713408
        %v637 = vunpack.c.0.s8 %v636
        %v638 = vlaneseq
        %v639 = vshrl.u32 %v638, 7
        %v640 = vsub.s32 %v637, %v639
        %v641 = vrot.slane %v627, %v640
        %v642 = vcombine.low %v609, %v625
        %v643 = vcombine.high %v609, %v625
        %v645 = vunpack.c.l.s4 1934713408
        %v646 = vunpack.c.0.s8 %v645
        %v647 = vlaneseq
        %v648 = vshrl.u32 %v647, 7
        %v649 = vsub.s32 %v646, %v648
        %v650 = vrot.slane %v642, %v649
        %v652 = vunpack.c.l.s4 1934713408
        %v653 = vunpack.c.0.s8 %v652
        %v654 = vlaneseq
        %v655 = vshrl.u32 %v654, 7
        %v656 = vsub.s32 %v653, %v655
        %v657 = vrot.slane %v643, %v656
        %v658 = vcombine.high %v634, 0.0
        %v659 = vcombine.high %v641, 0.0
        %v660 = vcombine.high %v650, 0.0
        %v661 = vcombine.high %v657, 0.0
        %v662 = vpack.c.bf16 %v634, %v634
        %v663 = vpack.c.bf16 %v658, %v658
        %v664 = vpack.c.bf16 %v641, %v641
        %v665 = vpack.c.bf16 %v659, %v659
        %v666 = vpack.c.bf16 %v650, %v650
        %v667 = vpack.c.bf16 %v660, %v660
        %v668 = vpack.c.bf16 %v657, %v657
        %v669 = vpack.c.bf16 %v661, %v661
        %670 = vrot.lane.b32.xlu0 %v579, 96
        %v671 = vpop.permute.xlu0 %670
        %672 = vrot.lane.b32.xlu0 %v586, 96
        %v673 = vpop.permute.xlu0 %672
        %674 = vrot.lane.b32.xlu0 %v589, 96
        %v675 = vpop.permute.xlu0 %674
        %676 = vrot.lane.b32.xlu0 %v592, 96
        %v677 = vpop.permute.xlu0 %676
        %v682 = vcombine.low %v671, %v675
        %v683 = vcombine.high %v671, %v675
        %v685 = vunpack.c.l.s4 1983009808
        %v686 = vunpack.c.0.s8 %v685
        %v687 = vlaneseq
        %v688 = vshrl.u32 %v687, 7
        %v689 = vsub.s32 %v686, %v688
        %v690 = vrot.slane %v682, %v689
        %v692 = vunpack.c.l.s4 1983009808
        %v693 = vunpack.c.0.s8 %v692
        %v694 = vlaneseq
        %v695 = vshrl.u32 %v694, 7
        %v696 = vsub.s32 %v693, %v695
        %v697 = vrot.slane %v683, %v696
        %v698 = vcombine.low %v673, %v677
        %v699 = vcombine.high %v673, %v677
        %v701 = vunpack.c.l.s4 1983009808
        %v702 = vunpack.c.0.s8 %v701
        %v703 = vlaneseq
        %v704 = vshrl.u32 %v703, 7
        %v705 = vsub.s32 %v702, %v704
        %v706 = vrot.slane %v698, %v705
        %v708 = vunpack.c.l.s4 1983009808
        %v709 = vunpack.c.0.s8 %v708
        %v710 = vlaneseq
        %v711 = vshrl.u32 %v710, 7
        %v712 = vsub.s32 %v709, %v711
        %v713 = vrot.slane %v699, %v712
        %v714 = vcombine.low %v690, %v706
        %v715 = vcombine.high %v690, %v706
        %v717 = vunpack.c.l.s4 1934713408
        %v718 = vunpack.c.0.s8 %v717
        %v719 = vlaneseq
        %v720 = vshrl.u32 %v719, 7
        %v721 = vsub.s32 %v718, %v720
        %v722 = vrot.slane %v714, %v721
        %v724 = vunpack.c.l.s4 1934713408
        %v725 = vunpack.c.0.s8 %v724
        %v726 = vlaneseq
        %v727 = vshrl.u32 %v726, 7
        %v728 = vsub.s32 %v725, %v727
        %v729 = vrot.slane %v715, %v728
        %v730 = vcombine.low %v697, %v713
        %v731 = vcombine.high %v697, %v713
        %v733 = vunpack.c.l.s4 1934713408
        %v734 = vunpack.c.0.s8 %v733
        %v735 = vlaneseq
        %v736 = vshrl.u32 %v735, 7
        %v737 = vsub.s32 %v734, %v736
        %v738 = vrot.slane %v730, %v737
        %v740 = vunpack.c.l.s4 1934713408
        %v741 = vunpack.c.0.s8 %v740
        %v742 = vlaneseq
        %v743 = vshrl.u32 %v742, 7
        %v744 = vsub.s32 %v741, %v743
        %v745 = vrot.slane %v731, %v744
        %v746 = vcombine.high %v722, 0.0
        %v747 = vcombine.high %v729, 0.0
        %v748 = vcombine.high %v738, 0.0
        %v749 = vcombine.high %v745, 0.0
        %v750 = vpack.c.bf16 %v722, %v722
        %v751 = vpack.c.bf16 %v746, %v746
        %v752 = vpack.c.bf16 %v729, %v729
        %v753 = vpack.c.bf16 %v747, %v747
        %v754 = vpack.c.bf16 %v738, %v738
        %v755 = vpack.c.bf16 %v748, %v748
        %v756 = vpack.c.bf16 %v745, %v745
        %v757 = vpack.c.bf16 %v749, %v749
        %758 = vrot.lane.b32.xlu0 %v579, 64
        %v759 = vpop.permute.xlu0 %758
        %760 = vrot.lane.b32.xlu0 %v586, 64
        %v761 = vpop.permute.xlu0 %760
        %762 = vrot.lane.b32.xlu0 %v589, 64
        %v763 = vpop.permute.xlu0 %762
        %764 = vrot.lane.b32.xlu0 %v592, 64
        %v765 = vpop.permute.xlu0 %764
        %v770 = vcombine.low %v759, %v763
        %v771 = vcombine.high %v759, %v763
        %v773 = vunpack.c.l.s4 1983009808
        %v774 = vunpack.c.0.s8 %v773
        %v775 = vlaneseq
        %v776 = vshrl.u32 %v775, 7
        %v777 = vsub.s32 %v774, %v776
        %v778 = vrot.slane %v770, %v777
        %v780 = vunpack.c.l.s4 1983009808
        %v781 = vunpack.c.0.s8 %v780
        %v782 = vlaneseq
        %v783 = vshrl.u32 %v782, 7
        %v784 = vsub.s32 %v781, %v783
        %v785 = vrot.slane %v771, %v784
        %v786 = vcombine.low %v761, %v765
        %v787 = vcombine.high %v761, %v765
        %v789 = vunpack.c.l.s4 1983009808
        %v790 = vunpack.c.0.s8 %v789
        %v791 = vlaneseq
        %v792 = vshrl.u32 %v791, 7
        %v793 = vsub.s32 %v790, %v792
        %v794 = vrot.slane %v786, %v793
        %v796 = vunpack.c.l.s4 1983009808
        %v797 = vunpack.c.0.s8 %v796
        %v798 = vlaneseq
        %v799 = vshrl.u32 %v798, 7
        %v800 = vsub.s32 %v797, %v799
        %v801 = vrot.slane %v787, %v800
        %v802 = vcombine.low %v778, %v794
        %v803 = vcombine.high %v778, %v794
        %v805 = vunpack.c.l.s4 1934713408
        %v806 = vunpack.c.0.s8 %v805
        %v807 = vlaneseq
        %v808 = vshrl.u32 %v807, 7
        %v809 = vsub.s32 %v806, %v808
        %v810 = vrot.slane %v802, %v809
        %v812 = vunpack.c.l.s4 1934713408
        %v813 = vunpack.c.0.s8 %v812
        %v814 = vlaneseq
        %v815 = vshrl.u32 %v814, 7
        %v816 = vsub.s32 %v813, %v815
        %v817 = vrot.slane %v803, %v816
        %v818 = vcombine.low %v785, %v801
        %v819 = vcombine.high %v785, %v801
        %v821 = vunpack.c.l.s4 1934713408
        %v822 = vunpack.c.0.s8 %v821
        %v823 = vlaneseq
        %v824 = vshrl.u32 %v823, 7
        %v825 = vsub.s32 %v822, %v824
        %v826 = vrot.slane %v818, %v825
        %v828 = vunpack.c.l.s4 1934713408
        %v829 = vunpack.c.0.s8 %v828
        %v830 = vlaneseq
        %v831 = vshrl.u32 %v830, 7
        %v832 = vsub.s32 %v829, %v831
        %v833 = vrot.slane %v819, %v832
        %v834 = vcombine.high %v810, 0.0
        %v835 = vcombine.high %v817, 0.0
        %v836 = vcombine.high %v826, 0.0
        %v837 = vcombine.high %v833, 0.0
        %v838 = vpack.c.bf16 %v810, %v810
        %v839 = vpack.c.bf16 %v834, %v834
        %v840 = vpack.c.bf16 %v817, %v817
        %v841 = vpack.c.bf16 %v835, %v835
        %v842 = vpack.c.bf16 %v826, %v826
        %v843 = vpack.c.bf16 %v836, %v836
        %v844 = vpack.c.bf16 %v833, %v833
        %v845 = vpack.c.bf16 %v837, %v837
        %v846 = vcombine.low %v662, %v666
        %v848 = vunpack.c.l.s4 1983009808
        %v849 = vunpack.c.0.s8 %v848
        %v850 = vlaneseq
        %v851 = vshrl.u32 %v850, 7
        %v852 = vsub.s32 %v849, %v851
        %v853 = vrot.slane %v846, %v852
        %v854 = vcombine.low %v664, %v668
        %v856 = vunpack.c.l.s4 1983009808
        %v857 = vunpack.c.0.s8 %v856
        %v858 = vlaneseq
        %v859 = vshrl.u32 %v858, 7
        %v860 = vsub.s32 %v857, %v859
        %v861 = vrot.slane %v854, %v860
        %v862 = vcombine.low %v853, %v861
        %v864 = vunpack.c.l.s4 1934713408
        %v865 = vunpack.c.0.s8 %v864
        %v866 = vlaneseq
        %v867 = vshrl.u32 %v866, 7
        %v868 = vsub.s32 %v865, %v867
        %v869 = vrot.slane %v862, %v868
        %v870 = vcombine.high %v869, 0
        %v871 = vcombine.low %v663, %v667
        %v873 = vunpack.c.l.s4 1983009808
        %v874 = vunpack.c.0.s8 %v873
        %v875 = vlaneseq
        %v876 = vshrl.u32 %v875, 7
        %v877 = vsub.s32 %v874, %v876
        %v878 = vrot.slane %v871, %v877
        %v879 = vcombine.low %v665, %v669
        %v881 = vunpack.c.l.s4 1983009808
        %v882 = vunpack.c.0.s8 %v881
        %v883 = vlaneseq
        %v884 = vshrl.u32 %v883, 7
        %v885 = vsub.s32 %v882, %v884
        %v886 = vrot.slane %v879, %v885
        %v887 = vcombine.low %v878, %v886
        %v889 = vunpack.c.l.s4 1934713408
        %v890 = vunpack.c.0.s8 %v889
        %v891 = vlaneseq
        %v892 = vshrl.u32 %v891, 7
        %v893 = vsub.s32 %v890, %v892
        %v894 = vrot.slane %v887, %v893
        %v895 = vcombine.high %v894, 0
        %v898 = vpack.i.b16 %v894, %v869
        %v899 = vshrl.u32 %v869, 16
        %v900 = vshrl.u32 %v894, 16
        %v901 = vpack.i.b16 %v900, %v899
        %v904 = vpack.i.b16 %v895, %v870
        %v905 = vshrl.u32 %v870, 16
        %v906 = vshrl.u32 %v895, 16
        %v907 = vpack.i.b16 %v906, %v905
        %908 = vxpose.xlu0.c.b16.start [1/8] %v750, 128
        %909 = vxpose.xlu0.c.b16.cont [2/8] 0, 128
        %910 = vxpose.xlu0.c.b16.cont [3/8] 0, 128
        %911 = vxpose.xlu0.c.b16.cont [4/8] 0, 128
        %912 = vxpose.xlu0.c.b16.cont [5/8] 0, 128
        %913 = vxpose.xlu0.c.b16.cont [6/8] 0, 128
        %914 = vxpose.xlu0.c.b16.cont [7/8] 0, 128
        %915 = vxpose.xlu0.c.b16.end [8/8] 0, 128
        %v916 = vpop.trf.xlu0
        %v917 = vpop.trf.xlu0
        %v918 = vpop.trf.xlu0
        %v919 = vpop.trf.xlu0
        %v920 = vpop.trf.xlu0
        %v921 = vpop.trf.xlu0
        %v922 = vpop.trf.xlu0
        %v923 = vpop.trf.xlu0
        %924 = vxpose.xlu0.c.b16.start [1/8] %v751, 128
        %925 = vxpose.xlu0.c.b16.cont [2/8] 0, 128
        %926 = vxpose.xlu0.c.b16.cont [3/8] 0, 128
        %927 = vxpose.xlu0.c.b16.cont [4/8] 0, 128
        %928 = vxpose.xlu0.c.b16.cont [5/8] 0, 128
        %929 = vxpose.xlu0.c.b16.cont [6/8] 0, 128
        %930 = vxpose.xlu0.c.b16.cont [7/8] 0, 128
        %931 = vxpose.xlu0.c.b16.end [8/8] 0, 128
        %v932 = vpop.trf.xlu0
        %v933 = vpop.trf.xlu0
        %v934 = vpop.trf.xlu0
        %v935 = vpop.trf.xlu0
        %v936 = vpop.trf.xlu0
        %v937 = vpop.trf.xlu0
        %v938 = vpop.trf.xlu0
        %v939 = vpop.trf.xlu0
        %940 = vxpose.xlu0.c.b16.start [1/8] %v752, 128
        %941 = vxpose.xlu0.c.b16.cont [2/8] 0, 128
        %942 = vxpose.xlu0.c.b16.cont [3/8] 0, 128
        %943 = vxpose.xlu0.c.b16.cont [4/8] 0, 128
        %944 = vxpose.xlu0.c.b16.cont [5/8] 0, 128
        %945 = vxpose.xlu0.c.b16.cont [6/8] 0, 128
        %946 = vxpose.xlu0.c.b16.cont [7/8] 0, 128
        %947 = vxpose.xlu0.c.b16.end [8/8] 0, 128
        %v948 = vpop.trf.xlu0
        %v949 = vpop.trf.xlu0
        %v950 = vpop.trf.xlu0
        %v951 = vpop.trf.xlu0
        %v952 = vpop.trf.xlu0
        %v953 = vpop.trf.xlu0
        %v954 = vpop.trf.xlu0
        %v955 = vpop.trf.xlu0
        %956 = vxpose.xlu0.c.b16.start [1/8] %v753, 128
        %957 = vxpose.xlu0.c.b16.cont [2/8] 0, 128
        %958 = vxpose.xlu0.c.b16.cont [3/8] 0, 128
        %959 = vxpose.xlu0.c.b16.cont [4/8] 0, 128
        %960 = vxpose.xlu0.c.b16.cont [5/8] 0, 128
        %961 = vxpose.xlu0.c.b16.cont [6/8] 0, 128
        %962 = vxpose.xlu0.c.b16.cont [7/8] 0, 128
        %963 = vxpose.xlu0.c.b16.end [8/8] 0, 128
        %v964 = vpop.trf.xlu0
        %v965 = vpop.trf.xlu0
        %v966 = vpop.trf.xlu0
        %v967 = vpop.trf.xlu0
        %v968 = vpop.trf.xlu0
        %v969 = vpop.trf.xlu0
        %v970 = vpop.trf.xlu0
        %v971 = vpop.trf.xlu0
        %972 = vxpose.xlu0.c.b16.start [1/8] %v754, 128
        %973 = vxpose.xlu0.c.b16.cont [2/8] 0, 128
        %974 = vxpose.xlu0.c.b16.cont [3/8] 0, 128
        %975 = vxpose.xlu0.c.b16.cont [4/8] 0, 128
        %976 = vxpose.xlu0.c.b16.cont [5/8] 0, 128
        %977 = vxpose.xlu0.c.b16.cont [6/8] 0, 128
        %978 = vxpose.xlu0.c.b16.cont [7/8] 0, 128
        %979 = vxpose.xlu0.c.b16.end [8/8] 0, 128
        %v980 = vpop.trf.xlu0
        %v981 = vpop.trf.xlu0
        %v982 = vpop.trf.xlu0
        %v983 = vpop.trf.xlu0
        %v984 = vpop.trf.xlu0
        %v985 = vpop.trf.xlu0
        %v986 = vpop.trf.xlu0
        %v987 = vpop.trf.xlu0
        %988 = vxpose.xlu0.c.b16.start [1/8] %v755, 128
        %989 = vxpose.xlu0.c.b16.cont [2/8] 0, 128
        %990 = vxpose.xlu0.c.b16.cont [3/8] 0, 128
        %991 = vxpose.xlu0.c.b16.cont [4/8] 0, 128
        %992 = vxpose.xlu0.c.b16.cont [5/8] 0, 128
        %993 = vxpose.xlu0.c.b16.cont [6/8] 0, 128
        %994 = vxpose.xlu0.c.b16.cont [7/8] 0, 128
        %995 = vxpose.xlu0.c.b16.end [8/8] 0, 128
        %v996 = vpop.trf.xlu0
        %v997 = vpop.trf.xlu0
        %v998 = vpop.trf.xlu0
        %v999 = vpop.trf.xlu0
        %v1000 = vpop.trf.xlu0
        %v1001 = vpop.trf.xlu0
        %v1002 = vpop.trf.xlu0
        %v1003 = vpop.trf.xlu0
        %1004 = vxpose.xlu0.c.b16.start [1/8] %v756, 128
        %1005 = vxpose.xlu0.c.b16.cont [2/8] 0, 128
        %1006 = vxpose.xlu0.c.b16.cont [3/8] 0, 128
        %1007 = vxpose.xlu0.c.b16.cont [4/8] 0, 128
        %1008 = vxpose.xlu0.c.b16.cont [5/8] 0, 128
        %1009 = vxpose.xlu0.c.b16.cont [6/8] 0, 128
        %1010 = vxpose.xlu0.c.b16.cont [7/8] 0, 128
        %1011 = vxpose.xlu0.c.b16.end [8/8] 0, 128
        %v1012 = vpop.trf.xlu0
        %v1013 = vpop.trf.xlu0
        %v1014 = vpop.trf.xlu0
        %v1015 = vpop.trf.xlu0
        %v1016 = vpop.trf.xlu0
        %v1017 = vpop.trf.xlu0
        %v1018 = vpop.trf.xlu0
        %v1019 = vpop.trf.xlu0
        %1020 = vxpose.xlu0.c.b16.start [1/8] %v757, 128
        %1021 = vxpose.xlu0.c.b16.cont [2/8] 0, 128
        %1022 = vxpose.xlu0.c.b16.cont [3/8] 0, 128
        %1023 = vxpose.xlu0.c.b16.cont [4/8] 0, 128
        %1024 = vxpose.xlu0.c.b16.cont [5/8] 0, 128
        %1025 = vxpose.xlu0.c.b16.cont [6/8] 0, 128
        %1026 = vxpose.xlu0.c.b16.cont [7/8] 0, 128
        %1027 = vxpose.xlu0.c.b16.end [8/8] 0, 128
        %v1028 = vpop.trf.xlu0
        %v1029 = vpop.trf.xlu0
        %v1030 = vpop.trf.xlu0
        %v1031 = vpop.trf.xlu0
        %v1032 = vpop.trf.xlu0
        %v1033 = vpop.trf.xlu0
        %v1034 = vpop.trf.xlu0
        %v1035 = vpop.trf.xlu0
        %v1036 = vcombine.low %v916, %v980
        %v1038 = vunpack.c.l.s4 1983009808
        %v1039 = vunpack.c.0.s8 %v1038
        %v1040 = vlaneseq
        %v1041 = vshrl.u32 %v1040, 7
        %v1042 = vsub.s32 %v1039, %v1041
        %v1043 = vrot.slane %v1036, %v1042
        %v1044 = vcombine.low %v948, %v1012
        %v1046 = vunpack.c.l.s4 1983009808
        %v1047 = vunpack.c.0.s8 %v1046
        %v1048 = vlaneseq
        %v1049 = vshrl.u32 %v1048, 7
        %v1050 = vsub.s32 %v1047, %v1049
        %v1051 = vrot.slane %v1044, %v1050
        %v1052 = vcombine.low %v1043, %v1051
        %v1053 = vcombine.high %v1043, %v1051
        %v1055 = vunpack.c.l.s4 1934713408
        %v1056 = vunpack.c.0.s8 %v1055
        %v1057 = vlaneseq
        %v1058 = vshrl.u32 %v1057, 7
        %v1059 = vsub.s32 %v1056, %v1058
        %v1060 = vrot.slane %v1052, %v1059
        %v1062 = vunpack.c.l.s4 1934713408
        %v1063 = vunpack.c.0.s8 %v1062
        %v1064 = vlaneseq
        %v1065 = vshrl.u32 %v1064, 7
        %v1066 = vsub.s32 %v1063, %v1065
        %v1067 = vrot.slane %v1053, %v1066
        %v1068 = vcombine.high %v1060, 0
        %v1069 = vcombine.high %v1067, 0
        %v1070 = vcombine.low %v932, %v996
        %v1072 = vunpack.c.l.s4 1983009808
        %v1073 = vunpack.c.0.s8 %v1072
        %v1074 = vlaneseq
        %v1075 = vshrl.u32 %v1074, 7
        %v1076 = vsub.s32 %v1073, %v1075
        %v1077 = vrot.slane %v1070, %v1076
        %v1078 = vcombine.low %v964, %v1028
        %v1080 = vunpack.c.l.s4 1983009808
        %v1081 = vunpack.c.0.s8 %v1080
        %v1082 = vlaneseq
        %v1083 = vshrl.u32 %v1082, 7
        %v1084 = vsub.s32 %v1081, %v1083
        %v1085 = vrot.slane %v1078, %v1084
        %v1086 = vcombine.low %v1077, %v1085
        %v1087 = vcombine.high %v1077, %v1085
        %v1089 = vunpack.c.l.s4 1934713408
        %v1090 = vunpack.c.0.s8 %v1089
        %v1091 = vlaneseq
        %v1092 = vshrl.u32 %v1091, 7
        %v1093 = vsub.s32 %v1090, %v1092
        %v1094 = vrot.slane %v1086, %v1093
        %v1096 = vunpack.c.l.s4 1934713408
        %v1097 = vunpack.c.0.s8 %v1096
        %v1098 = vlaneseq
        %v1099 = vshrl.u32 %v1098, 7
        %v1100 = vsub.s32 %v1097, %v1099
        %v1101 = vrot.slane %v1087, %v1100
        %v1102 = vcombine.high %v1094, 0
        %v1103 = vcombine.high %v1101, 0
        %v1106 = vpack.i.b16 %v1094, %v1060
        %v1108 = vshrl.u32 %v1060, 16
        %v1109 = vshrl.u32 %v1094, 16
        %v1110 = vpack.i.b16 %v1109, %v1108
        %v1114 = vpack.i.b16 %v1102, %v1068
        %v1116 = vshrl.u32 %v1068, 16
        %v1117 = vshrl.u32 %v1102, 16
        %v1118 = vpack.i.b16 %v1117, %v1116
        %v1122 = vpack.i.b16 %v1101, %v1067
        %v1124 = vshrl.u32 %v1067, 16
        %v1125 = vshrl.u32 %v1101, 16
        %v1126 = vpack.i.b16 %v1125, %v1124
        %v1130 = vpack.i.b16 %v1103, %v1069
        %v1132 = vshrl.u32 %v1069, 16
        %v1133 = vshrl.u32 %v1103, 16
        %v1134 = vpack.i.b16 %v1133, %v1132
        %1136 = vxpose.xlu0.c.b16.start [1/8] %v1106, 128
        %1137 = vxpose.xlu0.c.b16.cont [2/8] 0, 128
        %1138 = vxpose.xlu0.c.b16.cont [3/8] 0, 128
        %1139 = vxpose.xlu0.c.b16.cont [4/8] 0, 128
        %1140 = vxpose.xlu0.c.b16.cont [5/8] 0, 128
        %1141 = vxpose.xlu0.c.b16.cont [6/8] 0, 128
        %1142 = vxpose.xlu0.c.b16.cont [7/8] 0, 128
        %1143 = vxpose.xlu0.c.b16.end [8/8] 0, 128
        %v1144 = vpop.trf.xlu0
        %v1145 = vpop.trf.xlu0
        %v1146 = vpop.trf.xlu0
        %v1147 = vpop.trf.xlu0
        %v1148 = vpop.trf.xlu0
        %v1149 = vpop.trf.xlu0
        %v1150 = vpop.trf.xlu0
        %v1151 = vpop.trf.xlu0
        %1152 = vxpose.xlu0.c.b16.start [1/8] %v1110, 128
        %1153 = vxpose.xlu0.c.b16.cont [2/8] 0, 128
        %1154 = vxpose.xlu0.c.b16.cont [3/8] 0, 128
        %1155 = vxpose.xlu0.c.b16.cont [4/8] 0, 128
        %1156 = vxpose.xlu0.c.b16.cont [5/8] 0, 128
        %1157 = vxpose.xlu0.c.b16.cont [6/8] 0, 128
        %1158 = vxpose.xlu0.c.b16.cont [7/8] 0, 128
        %1159 = vxpose.xlu0.c.b16.end [8/8] 0, 128
        %v1160 = vpop.trf.xlu0
        %v1161 = vpop.trf.xlu0
        %v1162 = vpop.trf.xlu0
        %v1163 = vpop.trf.xlu0
        %v1164 = vpop.trf.xlu0
        %v1165 = vpop.trf.xlu0
        %v1166 = vpop.trf.xlu0
        %v1167 = vpop.trf.xlu0
        %1168 = vxpose.xlu0.c.b16.start [1/8] %v1114, 128
        %1169 = vxpose.xlu0.c.b16.cont [2/8] 0, 128
        %1170 = vxpose.xlu0.c.b16.cont [3/8] 0, 128
        %1171 = vxpose.xlu0.c.b16.cont [4/8] 0, 128
        %1172 = vxpose.xlu0.c.b16.cont [5/8] 0, 128
        %1173 = vxpose.xlu0.c.b16.cont [6/8] 0, 128
        %1174 = vxpose.xlu0.c.b16.cont [7/8] 0, 128
        %1175 = vxpose.xlu0.c.b16.end [8/8] 0, 128
        %v1176 = vpop.trf.xlu0
        %v1177 = vpop.trf.xlu0
        %v1178 = vpop.trf.xlu0
        %v1179 = vpop.trf.xlu0
        %v1180 = vpop.trf.xlu0
        %v1181 = vpop.trf.xlu0
        %v1182 = vpop.trf.xlu0
        %v1183 = vpop.trf.xlu0
        %1184 = vxpose.xlu0.c.b16.start [1/8] %v1118, 128
        %1185 = vxpose.xlu0.c.b16.cont [2/8] 0, 128
        %1186 = vxpose.xlu0.c.b16.cont [3/8] 0, 128
        %1187 = vxpose.xlu0.c.b16.cont [4/8] 0, 128
        %1188 = vxpose.xlu0.c.b16.cont [5/8] 0, 128
        %1189 = vxpose.xlu0.c.b16.cont [6/8] 0, 128
        %1190 = vxpose.xlu0.c.b16.cont [7/8] 0, 128
        %1191 = vxpose.xlu0.c.b16.end [8/8] 0, 128
        %v1192 = vpop.trf.xlu0
        %v1193 = vpop.trf.xlu0
        %v1194 = vpop.trf.xlu0
        %v1195 = vpop.trf.xlu0
        %v1196 = vpop.trf.xlu0
        %v1197 = vpop.trf.xlu0
        %v1198 = vpop.trf.xlu0
        %v1199 = vpop.trf.xlu0
        %1200 = vxpose.xlu0.c.b16.start [1/8] %v1122, 128
        %1201 = vxpose.xlu0.c.b16.cont [2/8] 0, 128
        %1202 = vxpose.xlu0.c.b16.cont [3/8] 0, 128
        %1203 = vxpose.xlu0.c.b16.cont [4/8] 0, 128
        %1204 = vxpose.xlu0.c.b16.cont [5/8] 0, 128
        %1205 = vxpose.xlu0.c.b16.cont [6/8] 0, 128
        %1206 = vxpose.xlu0.c.b16.cont [7/8] 0, 128
        %1207 = vxpose.xlu0.c.b16.end [8/8] 0, 128
        %v1208 = vpop.trf.xlu0
        %v1209 = vpop.trf.xlu0
        %v1210 = vpop.trf.xlu0
        %v1211 = vpop.trf.xlu0
        %v1212 = vpop.trf.xlu0
        %v1213 = vpop.trf.xlu0
        %v1214 = vpop.trf.xlu0
        %v1215 = vpop.trf.xlu0
        %1216 = vxpose.xlu0.c.b16.start [1/8] %v1126, 128
        %1217 = vxpose.xlu0.c.b16.cont [2/8] 0, 128
        %1218 = vxpose.xlu0.c.b16.cont [3/8] 0, 128
        %1219 = vxpose.xlu0.c.b16.cont [4/8] 0, 128
        %1220 = vxpose.xlu0.c.b16.cont [5/8] 0, 128
        %1221 = vxpose.xlu0.c.b16.cont [6/8] 0, 128
        %1222 = vxpose.xlu0.c.b16.cont [7/8] 0, 128
        %1223 = vxpose.xlu0.c.b16.end [8/8] 0, 128
        %v1224 = vpop.trf.xlu0
        %v1225 = vpop.trf.xlu0
        %v1226 = vpop.trf.xlu0
        %v1227 = vpop.trf.xlu0
        %v1228 = vpop.trf.xlu0
        %v1229 = vpop.trf.xlu0
        %v1230 = vpop.trf.xlu0
        %v1231 = vpop.trf.xlu0
        %1232 = vxpose.xlu0.c.b16.start [1/8] %v1130, 128
        %1233 = vxpose.xlu0.c.b16.cont [2/8] 0, 128
        %1234 = vxpose.xlu0.c.b16.cont [3/8] 0, 128
        %1235 = vxpose.xlu0.c.b16.cont [4/8] 0, 128
        %1236 = vxpose.xlu0.c.b16.cont [5/8] 0, 128
        %1237 = vxpose.xlu0.c.b16.cont [6/8] 0, 128
        %1238 = vxpose.xlu0.c.b16.cont [7/8] 0, 128
        %1239 = vxpose.xlu0.c.b16.end [8/8] 0, 128
        %v1240 = vpop.trf.xlu0
        %v1241 = vpop.trf.xlu0
        %v1242 = vpop.trf.xlu0
        %v1243 = vpop.trf.xlu0
        %v1244 = vpop.trf.xlu0
        %v1245 = vpop.trf.xlu0
        %v1246 = vpop.trf.xlu0
        %v1247 = vpop.trf.xlu0
        %1248 = vxpose.xlu0.c.b16.start [1/8] %v1134, 128
        %1249 = vxpose.xlu0.c.b16.cont [2/8] 0, 128
        %1250 = vxpose.xlu0.c.b16.cont [3/8] 0, 128
        %1251 = vxpose.xlu0.c.b16.cont [4/8] 0, 128
        %1252 = vxpose.xlu0.c.b16.cont [5/8] 0, 128
        %1253 = vxpose.xlu0.c.b16.cont [6/8] 0, 128
        %1254 = vxpose.xlu0.c.b16.cont [7/8] 0, 128
        %1255 = vxpose.xlu0.c.b16.end [8/8] 0, 128
        %v1256 = vpop.trf.xlu0
        %v1257 = vpop.trf.xlu0
        %v1258 = vpop.trf.xlu0
        %v1259 = vpop.trf.xlu0
        %v1260 = vpop.trf.xlu0
        %v1261 = vpop.trf.xlu0
        %v1262 = vpop.trf.xlu0
        %v1263 = vpop.trf.xlu0
        %v1264 = vcombine.low %v1144, %v1208
        %v1266 = vunpack.c.l.s4 1983009808
        %v1267 = vunpack.c.0.s8 %v1266
        %v1268 = vlaneseq
        %v1269 = vshrl.u32 %v1268, 7
        %v1270 = vsub.s32 %v1267, %v1269
        %v1271 = vrot.slane %v1264, %v1270
        %v1272 = vcombine.low %v1176, %v1240
        %v1274 = vunpack.c.l.s4 1983009808
        %v1275 = vunpack.c.0.s8 %v1274
        %v1276 = vlaneseq
        %v1277 = vshrl.u32 %v1276, 7
        %v1278 = vsub.s32 %v1275, %v1277
        %v1279 = vrot.slane %v1272, %v1278
        %v1280 = vcombine.low %v1271, %v1279
        %v1282 = vunpack.c.l.s4 1934713408
        %v1283 = vunpack.c.0.s8 %v1282
        %v1284 = vlaneseq
        %v1285 = vshrl.u32 %v1284, 7
        %v1286 = vsub.s32 %v1283, %v1285
        %v1287 = vrot.slane %v1280, %v1286
        %v1288 = vcombine.high %v1287, 0
        %v1289 = vcombine.low %v1160, %v1224
        %v1291 = vunpack.c.l.s4 1983009808
        %v1292 = vunpack.c.0.s8 %v1291
        %v1293 = vlaneseq
        %v1294 = vshrl.u32 %v1293, 7
        %v1295 = vsub.s32 %v1292, %v1294
        %v1296 = vrot.slane %v1289, %v1295
        %v1297 = vcombine.low %v1192, %v1256
        %v1299 = vunpack.c.l.s4 1983009808
        %v1300 = vunpack.c.0.s8 %v1299
        %v1301 = vlaneseq
        %v1302 = vshrl.u32 %v1301, 7
        %v1303 = vsub.s32 %v1300, %v1302
        %v1304 = vrot.slane %v1297, %v1303
        %v1305 = vcombine.low %v1296, %v1304
        %v1307 = vunpack.c.l.s4 1934713408
        %v1308 = vunpack.c.0.s8 %v1307
        %v1309 = vlaneseq
        %v1310 = vshrl.u32 %v1309, 7
        %v1311 = vsub.s32 %v1308, %v1310
        %v1312 = vrot.slane %v1305, %v1311
        %v1313 = vcombine.high %v1312, 0
        %v1316 = vpack.i.b16 %v1312, %v1287
        %v1317 = vshrl.u32 %v1287, 16
        %v1318 = vshrl.u32 %v1312, 16
        %v1319 = vpack.i.b16 %v1318, %v1317
        %v1322 = vpack.i.b16 %v1313, %v1288
        %v1323 = vshrl.u32 %v1288, 16
        %v1324 = vshrl.u32 %v1313, 16
        %v1325 = vpack.i.b16 %v1324, %v1323
        %vm1326 = vcmask 64512
        %v1328 = vsel %vm1326, %v898, 0
        %vm1330 = vcmask 1043456
        %v1332 = vsel %vm1330, %v1316, 0
        %1334 = vmatprep.subr.bf16.mxu0 0
        %1335 = vmatpush1.bf16.msra.mxu0 0
        %1336 = vmatprep.subr.bf16.mxu0 0
        %1337 = vmatpush1.bf16.msra.mxu0 0
        %1338 = vmatprep.subr.bf16.mxu0 0
        %1339 = vmatpush1.bf16.msra.mxu0 0
        %1340 = vmatprep.subr.bf16.mxu0 0
        %1341 = vmatpush1.bf16.msra.mxu0 0
        %1342 = vmatprep.subr.bf16.mxu0 0
        %1343 = vmatpush1.bf16.msra.mxu0 0
        %1344 = vmatprep.subr.bf16.mxu0 0
        %1345 = vmatpush1.bf16.msra.mxu0 0
        %1346 = vmatprep.subr.bf16.mxu0 0
        %1347 = vmatpush1.bf16.msra.mxu0 0
        %1348 = vmatprep.subr.bf16.mxu0 0
        %1349 = vmatpush1.bf16.msra.mxu0 %v1332
        %1350 = vmatprep.subr.bf16.mxu0 0
        %1351 = vmatpush2.bf16.msra.mxu0 0
        %1352 = vmatprep.subr.bf16.mxu0 0
        %1353 = vmatpush2.bf16.msra.mxu0 0
        %1354 = vmatprep.subr.bf16.mxu0 0
        %1355 = vmatpush2.bf16.msra.mxu0 0
        %1356 = vmatprep.subr.bf16.mxu0 0
        %1357 = vmatpush2.bf16.msra.mxu0 0
        %1358 = vmatprep.subr.bf16.mxu0 0
        %1359 = vmatpush2.bf16.msra.mxu0 0
        %1360 = vmatprep.subr.bf16.mxu0 0
        %1361 = vmatpush2.bf16.msra.mxu0 0
        %1362 = vmatprep.subr.bf16.mxu0 0
        %1363 = vmatpush2.bf16.msra.mxu0 0
        %1364 = vmatprep.subr.bf16.mxu0 0
        %1365 = vmatpush2.bf16.msra.mxu0 0
        %1366 = vmatprep.mubr.bf16.mxu0 0
        %1367 = vmatmul.mubr.bf16.gmra.mxu0 %v1328
        %v1368 = vpop.f32.mrf.mxu0
        %v1369 = vadd.f32 0.0, %v1368
        %v1370 = vpop.f32.mrf.mxu0
        %v1371 = vpop.f32.mrf.mxu0
        %v1372 = vpop.f32.mrf.mxu0
        %1373 = vdwg.mxu0
        %v1375 = vsel %vm1326, %v901, 0
        %v1378 = vsel %vm1330, %v1319, 0
        %1380 = vmatprep.subr.bf16.mxu0 0
        %1381 = vmatpush1.bf16.msra.mxu0 0
        %1382 = vmatprep.subr.bf16.mxu0 0
        %1383 = vmatpush1.bf16.msra.mxu0 0
        %1384 = vmatprep.subr.bf16.mxu0 0
        %1385 = vmatpush1.bf16.msra.mxu0 0
        %1386 = vmatprep.subr.bf16.mxu0 0
        %1387 = vmatpush1.bf16.msra.mxu0 0
        %1388 = vmatprep.subr.bf16.mxu0 0
        %1389 = vmatpush1.bf16.msra.mxu0 0
        %1390 = vmatprep.subr.bf16.mxu0 0
        %1391 = vmatpush1.bf16.msra.mxu0 0
        %1392 = vmatprep.subr.bf16.mxu0 0
        %1393 = vmatpush1.bf16.msra.mxu0 0
        %1394 = vmatprep.subr.bf16.mxu0 0
        %1395 = vmatpush1.bf16.msra.mxu0 %v1378
        %1396 = vmatprep.subr.bf16.mxu0 0
        %1397 = vmatpush2.bf16.msra.mxu0 0
        %1398 = vmatprep.subr.bf16.mxu0 0
        %1399 = vmatpush2.bf16.msra.mxu0 0
        %1400 = vmatprep.subr.bf16.mxu0 0
        %1401 = vmatpush2.bf16.msra.mxu0 0
        %1402 = vmatprep.subr.bf16.mxu0 0
        %1403 = vmatpush2.bf16.msra.mxu0 0
        %1404 = vmatprep.subr.bf16.mxu0 0
        %1405 = vmatpush2.bf16.msra.mxu0 0
        %1406 = vmatprep.subr.bf16.mxu0 0
        %1407 = vmatpush2.bf16.msra.mxu0 0
        %1408 = vmatprep.subr.bf16.mxu0 0
        %1409 = vmatpush2.bf16.msra.mxu0 0
        %1410 = vmatprep.subr.bf16.mxu0 0
        %1411 = vmatpush2.bf16.msra.mxu0 0
        %1412 = vmatprep.mubr.bf16.mxu0 0
        %1413 = vmatmul.mubr.bf16.gmra.mxu0 %v1375
        %v1414 = vpop.f32.mrf.mxu0
        %v1415 = vadd.f32 0.0, %v1414
        %v1416 = vpop.f32.mrf.mxu0
        %v1417 = vpop.f32.mrf.mxu0
        %v1418 = vpop.f32.mrf.mxu0
        %1419 = vdwg.mxu0
        %v1421 = vsel %vm1326, %v904, 0
        %v1424 = vsel %vm1330, %v1322, 0
        %1426 = vmatprep.subr.bf16.mxu0 0
        %1427 = vmatpush1.bf16.msra.mxu0 0
        %1428 = vmatprep.subr.bf16.mxu0 0
        %1429 = vmatpush1.bf16.msra.mxu0 0
        %1430 = vmatprep.subr.bf16.mxu0 0
        %1431 = vmatpush1.bf16.msra.mxu0 0
        %1432 = vmatprep.subr.bf16.mxu0 0
        %1433 = vmatpush1.bf16.msra.mxu0 0
        %1434 = vmatprep.subr.bf16.mxu0 0
        %1435 = vmatpush1.bf16.msra.mxu0 0
        %1436 = vmatprep.subr.bf16.mxu0 0
        %1437 = vmatpush1.bf16.msra.mxu0 0
        %1438 = vmatprep.subr.bf16.mxu0 0
        %1439 = vmatpush1.bf16.msra.mxu0 0
        %1440 = vmatprep.subr.bf16.mxu0 0
        %1441 = vmatpush1.bf16.msra.mxu0 %v1424
        %1442 = vmatprep.subr.bf16.mxu0 0
        %1443 = vmatpush2.bf16.msra.mxu0 0
        %1444 = vmatprep.subr.bf16.mxu0 0
        %1445 = vmatpush2.bf16.msra.mxu0 0
        %1446 = vmatprep.subr.bf16.mxu0 0
        %1447 = vmatpush2.bf16.msra.mxu0 0
        %1448 = vmatprep.subr.bf16.mxu0 0
        %1449 = vmatpush2.bf16.msra.mxu0 0
        %1450 = vmatprep.subr.bf16.mxu0 0
        %1451 = vmatpush2.bf16.msra.mxu0 0
        %1452 = vmatprep.subr.bf16.mxu0 0
        %1453 = vmatpush2.bf16.msra.mxu0 0
        %1454 = vmatprep.subr.bf16.mxu0 0
        %1455 = vmatpush2.bf16.msra.mxu0 0
        %1456 = vmatprep.subr.bf16.mxu0 0
        %1457 = vmatpush2.bf16.msra.mxu0 0
        %1458 = vmatprep.mubr.bf16.mxu0 0
        %1459 = vmatmul.mubr.bf16.gmra.mxu0 %v1421
        %v1460 = vpop.f32.mrf.mxu0
        %v1461 = vadd.f32 0.0, %v1460
        %v1462 = vpop.f32.mrf.mxu0
        %v1463 = vpop.f32.mrf.mxu0
        %v1464 = vpop.f32.mrf.mxu0
        %1465 = vdwg.mxu0
        %v1467 = vsel %vm1326, %v907, 0
        %v1470 = vsel %vm1330, %v1325, 0
        %1472 = vmatprep.subr.bf16.mxu0 0
        %1473 = vmatpush1.bf16.msra.mxu0 0
        %1474 = vmatprep.subr.bf16.mxu0 0
        %1475 = vmatpush1.bf16.msra.mxu0 0
        %1476 = vmatprep.subr.bf16.mxu0 0
        %1477 = vmatpush1.bf16.msra.mxu0 0
        %1478 = vmatprep.subr.bf16.mxu0 0
        %1479 = vmatpush1.bf16.msra.mxu0 0
        %1480 = vmatprep.subr.bf16.mxu0 0
        %1481 = vmatpush1.bf16.msra.mxu0 0
        %1482 = vmatprep.subr.bf16.mxu0 0
        %1483 = vmatpush1.bf16.msra.mxu0 0
        %1484 = vmatprep.subr.bf16.mxu0 0
        %1485 = vmatpush1.bf16.msra.mxu0 0
        %1486 = vmatprep.subr.bf16.mxu0 0
        %1487 = vmatpush1.bf16.msra.mxu0 %v1470
        %1488 = vmatprep.subr.bf16.mxu0 0
        %1489 = vmatpush2.bf16.msra.mxu0 0
        %1490 = vmatprep.subr.bf16.mxu0 0
        %1491 = vmatpush2.bf16.msra.mxu0 0
        %1492 = vmatprep.subr.bf16.mxu0 0
        %1493 = vmatpush2.bf16.msra.mxu0 0
        %1494 = vmatprep.subr.bf16.mxu0 0
        %1495 = vmatpush2.bf16.msra.mxu0 0
        %1496 = vmatprep.subr.bf16.mxu0 0
        %1497 = vmatpush2.bf16.msra.mxu0 0
        %1498 = vmatprep.subr.bf16.mxu0 0
        %1499 = vmatpush2.bf16.msra.mxu0 0
        %1500 = vmatprep.subr.bf16.mxu0 0
        %1501 = vmatpush2.bf16.msra.mxu0 0
        %1502 = vmatprep.subr.bf16.mxu0 0
        %1503 = vmatpush2.bf16.msra.mxu0 0
        %1504 = vmatprep.mubr.bf16.mxu0 0
        %1505 = vmatmul.mubr.bf16.gmra.mxu0 %v1467
        %v1506 = vpop.f32.mrf.mxu0
        %v1507 = vadd.f32 0.0, %v1506
        %v1508 = vpop.f32.mrf.mxu0
        %v1509 = vpop.f32.mrf.mxu0
        %v1510 = vpop.f32.mrf.mxu0
        %1511 = vdwg.mxu0
        %v1512 = vmul.f32 %v1369, 0.35355338
        %v1513 = vmul.f32 %v1415, 0.35355338
        %v1514 = vmul.f32 %v1461, 0.35355338
        %v1515 = vmul.f32 %v1507, 0.35355338
        %v1516 = vsel %vm1326, %v1512, -inf
        %1517 = vmax.xlane.f32.xlu0 %v1516
        %v1518 = vpop.xlane.xlu0 %1517
        %v1519 = vsel %vm1326, %v1513, -inf
        %1520 = vmax.xlane.f32.xlu0 %v1519
        %v1521 = vpop.xlane.xlu0 %1520
        %v1522 = vsel %vm1326, %v1514, -inf
        %1523 = vmax.xlane.f32.xlu0 %v1522
        %v1524 = vpop.xlane.xlu0 %1523
        %v1525 = vsel %vm1326, %v1515, -inf
        %1526 = vmax.xlane.f32.xlu0 %v1525
        %v1527 = vpop.xlane.xlu0 %1526
        %v1528 = vsub.f32 %v1512, %v1518
        %v1529 = vsub.f32 %v1513, %v1521
        %v1530 = vsub.f32 %v1514, %v1524
        %v1531 = vsub.f32 %v1515, %v1527
        %v1532 = vmul.f32 %v1528, 1.442695
        %v1533 = vpow.pop %v1532
        %v1534 = vmul.f32 %v1529, 1.442695
        %v1535 = vpow.pop %v1534
        %v1536 = vmul.f32 %v1530, 1.442695
        %v1537 = vpow.pop %v1536
        %v1538 = vmul.f32 %v1531, 1.442695
        %v1539 = vpow.pop %v1538
        %v1540 = vsel %vm1326, %v1533, 0.0
        %1541 = vadd.xlane.f32.xlu0 %v1540
        %v1542 = vpop.xlane.xlu0 %1541
        %v1543 = vsel %vm1326, %v1535, 0.0
        %1544 = vadd.xlane.f32.xlu0 %v1543
        %v1545 = vpop.xlane.xlu0 %1544
        %v1546 = vsel %vm1326, %v1537, 0.0
        %1547 = vadd.xlane.f32.xlu0 %v1546
        %v1548 = vpop.xlane.xlu0 %1547
        %v1549 = vsel %vm1326, %v1539, 0.0
        %1550 = vadd.xlane.f32.xlu0 %v1549
        %v1551 = vpop.xlane.xlu0 %1550
        %v1552 = vrcp.pop %v1542
        %v1553 = vrcp.pop %v1545
        %v1554 = vrcp.pop %v1548
        %v1555 = vrcp.pop %v1551
        %v1556 = vmul.f32 %v1533, %v1552
        %v1557 = vmul.f32 %v1535, %v1553
        %v1558 = vmul.f32 %v1537, %v1554
        %v1559 = vmul.f32 %v1539, %v1555
        %v1560 = vpack.c.bf16 %v1556, %v1556
        %v1561 = vpack.c.bf16 %v1557, %v1557
        %v1562 = vpack.c.bf16 %v1558, %v1558
        %v1563 = vpack.c.bf16 %v1559, %v1559
        %1564 = vxpose.xlu0.c.b16.start [1/8] %v838, 128
        %1565 = vxpose.xlu0.c.b16.cont [2/8] 0, 128
        %1566 = vxpose.xlu0.c.b16.cont [3/8] 0, 128
        %1567 = vxpose.xlu0.c.b16.cont [4/8] 0, 128
        %1568 = vxpose.xlu0.c.b16.cont [5/8] 0, 128
        %1569 = vxpose.xlu0.c.b16.cont [6/8] 0, 128
        %1570 = vxpose.xlu0.c.b16.cont [7/8] 0, 128
        %1571 = vxpose.xlu0.c.b16.end [8/8] 0, 128
        %v1572 = vpop.trf.xlu0
        %v1573 = vpop.trf.xlu0
        %v1574 = vpop.trf.xlu0
        %v1575 = vpop.trf.xlu0
        %v1576 = vpop.trf.xlu0
        %v1577 = vpop.trf.xlu0
        %v1578 = vpop.trf.xlu0
        %v1579 = vpop.trf.xlu0
        %1580 = vxpose.xlu0.c.b16.start [1/8] %v839, 128
        %1581 = vxpose.xlu0.c.b16.cont [2/8] 0, 128
        %1582 = vxpose.xlu0.c.b16.cont [3/8] 0, 128
        %1583 = vxpose.xlu0.c.b16.cont [4/8] 0, 128
        %1584 = vxpose.xlu0.c.b16.cont [5/8] 0, 128
        %1585 = vxpose.xlu0.c.b16.cont [6/8] 0, 128
        %1586 = vxpose.xlu0.c.b16.cont [7/8] 0, 128
        %1587 = vxpose.xlu0.c.b16.end [8/8] 0, 128
        %v1588 = vpop.trf.xlu0
        %v1589 = vpop.trf.xlu0
        %v1590 = vpop.trf.xlu0
        %v1591 = vpop.trf.xlu0
        %v1592 = vpop.trf.xlu0
        %v1593 = vpop.trf.xlu0
        %v1594 = vpop.trf.xlu0
        %v1595 = vpop.trf.xlu0
        %1596 = vxpose.xlu0.c.b16.start [1/8] %v840, 128
        %1597 = vxpose.xlu0.c.b16.cont [2/8] 0, 128
        %1598 = vxpose.xlu0.c.b16.cont [3/8] 0, 128
        %1599 = vxpose.xlu0.c.b16.cont [4/8] 0, 128
        %1600 = vxpose.xlu0.c.b16.cont [5/8] 0, 128
        %1601 = vxpose.xlu0.c.b16.cont [6/8] 0, 128
        %1602 = vxpose.xlu0.c.b16.cont [7/8] 0, 128
        %1603 = vxpose.xlu0.c.b16.end [8/8] 0, 128
        %v1604 = vpop.trf.xlu0
        %v1605 = vpop.trf.xlu0
        %v1606 = vpop.trf.xlu0
        %v1607 = vpop.trf.xlu0
        %v1608 = vpop.trf.xlu0
        %v1609 = vpop.trf.xlu0
        %v1610 = vpop.trf.xlu0
        %v1611 = vpop.trf.xlu0
        %1612 = vxpose.xlu0.c.b16.start [1/8] %v841, 128
        %1613 = vxpose.xlu0.c.b16.cont [2/8] 0, 128
        %1614 = vxpose.xlu0.c.b16.cont [3/8] 0, 128
        %1615 = vxpose.xlu0.c.b16.cont [4/8] 0, 128
        %1616 = vxpose.xlu0.c.b16.cont [5/8] 0, 128
        %1617 = vxpose.xlu0.c.b16.cont [6/8] 0, 128
        %1618 = vxpose.xlu0.c.b16.cont [7/8] 0, 128
        %1619 = vxpose.xlu0.c.b16.end [8/8] 0, 128
        %v1620 = vpop.trf.xlu0
        %v1621 = vpop.trf.xlu0
        %v1622 = vpop.trf.xlu0
        %v1623 = vpop.trf.xlu0
        %v1624 = vpop.trf.xlu0
        %v1625 = vpop.trf.xlu0
        %v1626 = vpop.trf.xlu0
        %v1627 = vpop.trf.xlu0
        %1628 = vxpose.xlu0.c.b16.start [1/8] %v842, 128
        %1629 = vxpose.xlu0.c.b16.cont [2/8] 0, 128
        %1630 = vxpose.xlu0.c.b16.cont [3/8] 0, 128
        %1631 = vxpose.xlu0.c.b16.cont [4/8] 0, 128
        %1632 = vxpose.xlu0.c.b16.cont [5/8] 0, 128
        %1633 = vxpose.xlu0.c.b16.cont [6/8] 0, 128
        %1634 = vxpose.xlu0.c.b16.cont [7/8] 0, 128
        %1635 = vxpose.xlu0.c.b16.end [8/8] 0, 128
        %v1636 = vpop.trf.xlu0
        %v1637 = vpop.trf.xlu0
        %v1638 = vpop.trf.xlu0
        %v1639 = vpop.trf.xlu0
        %v1640 = vpop.trf.xlu0
        %v1641 = vpop.trf.xlu0
        %v1642 = vpop.trf.xlu0
        %v1643 = vpop.trf.xlu0
        %1644 = vxpose.xlu0.c.b16.start [1/8] %v843, 128
        %1645 = vxpose.xlu0.c.b16.cont [2/8] 0, 128
        %1646 = vxpose.xlu0.c.b16.cont [3/8] 0, 128
        %1647 = vxpose.xlu0.c.b16.cont [4/8] 0, 128
        %1648 = vxpose.xlu0.c.b16.cont [5/8] 0, 128
        %1649 = vxpose.xlu0.c.b16.cont [6/8] 0, 128
        %1650 = vxpose.xlu0.c.b16.cont [7/8] 0, 128
        %1651 = vxpose.xlu0.c.b16.end [8/8] 0, 128
        %v1652 = vpop.trf.xlu0
        %v1653 = vpop.trf.xlu0
        %v1654 = vpop.trf.xlu0
        %v1655 = vpop.trf.xlu0
        %v1656 = vpop.trf.xlu0
        %v1657 = vpop.trf.xlu0
        %v1658 = vpop.trf.xlu0
        %v1659 = vpop.trf.xlu0
        %1660 = vxpose.xlu0.c.b16.start [1/8] %v844, 128
        %1661 = vxpose.xlu0.c.b16.cont [2/8] 0, 128
        %1662 = vxpose.xlu0.c.b16.cont [3/8] 0, 128
        %1663 = vxpose.xlu0.c.b16.cont [4/8] 0, 128
        %1664 = vxpose.xlu0.c.b16.cont [5/8] 0, 128
        %1665 = vxpose.xlu0.c.b16.cont [6/8] 0, 128
        %1666 = vxpose.xlu0.c.b16.cont [7/8] 0, 128
        %1667 = vxpose.xlu0.c.b16.end [8/8] 0, 128
        %v1668 = vpop.trf.xlu0
        %v1669 = vpop.trf.xlu0
        %v1670 = vpop.trf.xlu0
        %v1671 = vpop.trf.xlu0
        %v1672 = vpop.trf.xlu0
        %v1673 = vpop.trf.xlu0
        %v1674 = vpop.trf.xlu0
        %v1675 = vpop.trf.xlu0
        %1676 = vxpose.xlu0.c.b16.start [1/8] %v845, 128
        %1677 = vxpose.xlu0.c.b16.cont [2/8] 0, 128
        %1678 = vxpose.xlu0.c.b16.cont [3/8] 0, 128
        %1679 = vxpose.xlu0.c.b16.cont [4/8] 0, 128
        %1680 = vxpose.xlu0.c.b16.cont [5/8] 0, 128
        %1681 = vxpose.xlu0.c.b16.cont [6/8] 0, 128
        %1682 = vxpose.xlu0.c.b16.cont [7/8] 0, 128
        %1683 = vxpose.xlu0.c.b16.end [8/8] 0, 128
        %v1684 = vpop.trf.xlu0
        %v1685 = vpop.trf.xlu0
        %v1686 = vpop.trf.xlu0
        %v1687 = vpop.trf.xlu0
        %v1688 = vpop.trf.xlu0
        %v1689 = vpop.trf.xlu0
        %v1690 = vpop.trf.xlu0
        %v1691 = vpop.trf.xlu0
        %v1692 = vcombine.low %v1572, %v1636
        %v1694 = vunpack.c.l.s4 1983009808
        %v1695 = vunpack.c.0.s8 %v1694
        %v1696 = vlaneseq
        %v1697 = vshrl.u32 %v1696, 7
        %v1698 = vsub.s32 %v1695, %v1697
        %v1699 = vrot.slane %v1692, %v1698
        %v1700 = vcombine.low %v1604, %v1668
        %v1702 = vunpack.c.l.s4 1983009808
        %v1703 = vunpack.c.0.s8 %v1702
        %v1704 = vlaneseq
        %v1705 = vshrl.u32 %v1704, 7
        %v1706 = vsub.s32 %v1703, %v1705
        %v1707 = vrot.slane %v1700, %v1706
        %v1708 = vcombine.low %v1699, %v1707
        %v1709 = vcombine.high %v1699, %v1707
        %v1711 = vunpack.c.l.s4 1934713408
        %v1712 = vunpack.c.0.s8 %v1711
        %v1713 = vlaneseq
        %v1714 = vshrl.u32 %v1713, 7
        %v1715 = vsub.s32 %v1712, %v1714
        %v1716 = vrot.slane %v1708, %v1715
        %v1718 = vunpack.c.l.s4 1934713408
        %v1719 = vunpack.c.0.s8 %v1718
        %v1720 = vlaneseq
        %v1721 = vshrl.u32 %v1720, 7
        %v1722 = vsub.s32 %v1719, %v1721
        %v1723 = vrot.slane %v1709, %v1722
        %v1724 = vcombine.high %v1716, 0
        %v1725 = vcombine.high %v1723, 0
        %v1726 = vcombine.low %v1588, %v1652
        %v1728 = vunpack.c.l.s4 1983009808
        %v1729 = vunpack.c.0.s8 %v1728
        %v1730 = vlaneseq
        %v1731 = vshrl.u32 %v1730, 7
        %v1732 = vsub.s32 %v1729, %v1731
        %v1733 = vrot.slane %v1726, %v1732
        %v1734 = vcombine.low %v1620, %v1684
        %v1736 = vunpack.c.l.s4 1983009808
        %v1737 = vunpack.c.0.s8 %v1736
        %v1738 = vlaneseq
        %v1739 = vshrl.u32 %v1738, 7
        %v1740 = vsub.s32 %v1737, %v1739
        %v1741 = vrot.slane %v1734, %v1740
        %v1742 = vcombine.low %v1733, %v1741
        %v1743 = vcombine.high %v1733, %v1741
        %v1745 = vunpack.c.l.s4 1934713408
        %v1746 = vunpack.c.0.s8 %v1745
        %v1747 = vlaneseq
        %v1748 = vshrl.u32 %v1747, 7
        %v1749 = vsub.s32 %v1746, %v1748
        %v1750 = vrot.slane %v1742, %v1749
        %v1752 = vunpack.c.l.s4 1934713408
        %v1753 = vunpack.c.0.s8 %v1752
        %v1754 = vlaneseq
        %v1755 = vshrl.u32 %v1754, 7
        %v1756 = vsub.s32 %v1753, %v1755
        %v1757 = vrot.slane %v1743, %v1756
        %v1758 = vcombine.high %v1750, 0
        %v1759 = vcombine.high %v1757, 0
        %v1762 = vpack.i.b16 %v1750, %v1716
        %v1764 = vshrl.u32 %v1716, 16
        %v1765 = vshrl.u32 %v1750, 16
        %v1766 = vpack.i.b16 %v1765, %v1764
        %v1770 = vpack.i.b16 %v1758, %v1724
        %v1772 = vshrl.u32 %v1724, 16
        %v1773 = vshrl.u32 %v1758, 16
        %v1774 = vpack.i.b16 %v1773, %v1772
        %v1778 = vpack.i.b16 %v1757, %v1723
        %v1780 = vshrl.u32 %v1723, 16
        %v1781 = vshrl.u32 %v1757, 16
        %v1782 = vpack.i.b16 %v1781, %v1780
        %v1786 = vpack.i.b16 %v1759, %v1725
        %v1788 = vshrl.u32 %v1725, 16
        %v1789 = vshrl.u32 %v1759, 16
        %v1790 = vpack.i.b16 %v1789, %v1788
        %1792 = vxpose.xlu0.c.b16.start [1/8] %v1762, 128
        %1793 = vxpose.xlu0.c.b16.cont [2/8] 0, 128
        %1794 = vxpose.xlu0.c.b16.cont [3/8] 0, 128
        %1795 = vxpose.xlu0.c.b16.cont [4/8] 0, 128
        %1796 = vxpose.xlu0.c.b16.cont [5/8] 0, 128
        %1797 = vxpose.xlu0.c.b16.cont [6/8] 0, 128
        %1798 = vxpose.xlu0.c.b16.cont [7/8] 0, 128
        %1799 = vxpose.xlu0.c.b16.end [8/8] 0, 128
        %v1800 = vpop.trf.xlu0
        %v1801 = vpop.trf.xlu0
        %v1802 = vpop.trf.xlu0
        %v1803 = vpop.trf.xlu0
        %v1804 = vpop.trf.xlu0
        %v1805 = vpop.trf.xlu0
        %v1806 = vpop.trf.xlu0
        %v1807 = vpop.trf.xlu0
        %1808 = vxpose.xlu0.c.b16.start [1/8] %v1766, 128
        %1809 = vxpose.xlu0.c.b16.cont [2/8] 0, 128
        %1810 = vxpose.xlu0.c.b16.cont [3/8] 0, 128
        %1811 = vxpose.xlu0.c.b16.cont [4/8] 0, 128
        %1812 = vxpose.xlu0.c.b16.cont [5/8] 0, 128
        %1813 = vxpose.xlu0.c.b16.cont [6/8] 0, 128
        %1814 = vxpose.xlu0.c.b16.cont [7/8] 0, 128
        %1815 = vxpose.xlu0.c.b16.end [8/8] 0, 128
        %v1816 = vpop.trf.xlu0
        %v1817 = vpop.trf.xlu0
        %v1818 = vpop.trf.xlu0
        %v1819 = vpop.trf.xlu0
        %v1820 = vpop.trf.xlu0
        %v1821 = vpop.trf.xlu0
        %v1822 = vpop.trf.xlu0
        %v1823 = vpop.trf.xlu0
        %1824 = vxpose.xlu0.c.b16.start [1/8] %v1770, 128
        %1825 = vxpose.xlu0.c.b16.cont [2/8] 0, 128
        %1826 = vxpose.xlu0.c.b16.cont [3/8] 0, 128
        %1827 = vxpose.xlu0.c.b16.cont [4/8] 0, 128
        %1828 = vxpose.xlu0.c.b16.cont [5/8] 0, 128
        %1829 = vxpose.xlu0.c.b16.cont [6/8] 0, 128
        %1830 = vxpose.xlu0.c.b16.cont [7/8] 0, 128
        %1831 = vxpose.xlu0.c.b16.end [8/8] 0, 128
        %v1832 = vpop.trf.xlu0
        %v1833 = vpop.trf.xlu0
        %v1834 = vpop.trf.xlu0
        %v1835 = vpop.trf.xlu0
        %v1836 = vpop.trf.xlu0
        %v1837 = vpop.trf.xlu0
        %v1838 = vpop.trf.xlu0
        %v1839 = vpop.trf.xlu0
        %1840 = vxpose.xlu0.c.b16.start [1/8] %v1774, 128
        %1841 = vxpose.xlu0.c.b16.cont [2/8] 0, 128
        %1842 = vxpose.xlu0.c.b16.cont [3/8] 0, 128
        %1843 = vxpose.xlu0.c.b16.cont [4/8] 0, 128
        %1844 = vxpose.xlu0.c.b16.cont [5/8] 0, 128
        %1845 = vxpose.xlu0.c.b16.cont [6/8] 0, 128
        %1846 = vxpose.xlu0.c.b16.cont [7/8] 0, 128
        %1847 = vxpose.xlu0.c.b16.end [8/8] 0, 128
        %v1848 = vpop.trf.xlu0
        %v1849 = vpop.trf.xlu0
        %v1850 = vpop.trf.xlu0
        %v1851 = vpop.trf.xlu0
        %v1852 = vpop.trf.xlu0
        %v1853 = vpop.trf.xlu0
        %v1854 = vpop.trf.xlu0
        %v1855 = vpop.trf.xlu0
        %1856 = vxpose.xlu0.c.b16.start [1/8] %v1778, 128
        %1857 = vxpose.xlu0.c.b16.cont [2/8] 0, 128
        %1858 = vxpose.xlu0.c.b16.cont [3/8] 0, 128
        %1859 = vxpose.xlu0.c.b16.cont [4/8] 0, 128
        %1860 = vxpose.xlu0.c.b16.cont [5/8] 0, 128
        %1861 = vxpose.xlu0.c.b16.cont [6/8] 0, 128
        %1862 = vxpose.xlu0.c.b16.cont [7/8] 0, 128
        %1863 = vxpose.xlu0.c.b16.end [8/8] 0, 128
        %v1864 = vpop.trf.xlu0
        %v1865 = vpop.trf.xlu0
        %v1866 = vpop.trf.xlu0
        %v1867 = vpop.trf.xlu0
        %v1868 = vpop.trf.xlu0
        %v1869 = vpop.trf.xlu0
        %v1870 = vpop.trf.xlu0
        %v1871 = vpop.trf.xlu0
        %1872 = vxpose.xlu0.c.b16.start [1/8] %v1782, 128
        %1873 = vxpose.xlu0.c.b16.cont [2/8] 0, 128
        %1874 = vxpose.xlu0.c.b16.cont [3/8] 0, 128
        %1875 = vxpose.xlu0.c.b16.cont [4/8] 0, 128
        %1876 = vxpose.xlu0.c.b16.cont [5/8] 0, 128
        %1877 = vxpose.xlu0.c.b16.cont [6/8] 0, 128
        %1878 = vxpose.xlu0.c.b16.cont [7/8] 0, 128
        %1879 = vxpose.xlu0.c.b16.end [8/8] 0, 128
        %v1880 = vpop.trf.xlu0
        %v1881 = vpop.trf.xlu0
        %v1882 = vpop.trf.xlu0
        %v1883 = vpop.trf.xlu0
        %v1884 = vpop.trf.xlu0
        %v1885 = vpop.trf.xlu0
        %v1886 = vpop.trf.xlu0
        %v1887 = vpop.trf.xlu0
        %1888 = vxpose.xlu0.c.b16.start [1/8] %v1786, 128
        %1889 = vxpose.xlu0.c.b16.cont [2/8] 0, 128
        %1890 = vxpose.xlu0.c.b16.cont [3/8] 0, 128
        %1891 = vxpose.xlu0.c.b16.cont [4/8] 0, 128
        %1892 = vxpose.xlu0.c.b16.cont [5/8] 0, 128
        %1893 = vxpose.xlu0.c.b16.cont [6/8] 0, 128
        %1894 = vxpose.xlu0.c.b16.cont [7/8] 0, 128
        %1895 = vxpose.xlu0.c.b16.end [8/8] 0, 128
        %v1896 = vpop.trf.xlu0
        %v1897 = vpop.trf.xlu0
        %v1898 = vpop.trf.xlu0
        %v1899 = vpop.trf.xlu0
        %v1900 = vpop.trf.xlu0
        %v1901 = vpop.trf.xlu0
        %v1902 = vpop.trf.xlu0
        %v1903 = vpop.trf.xlu0
        %1904 = vxpose.xlu0.c.b16.start [1/8] %v1790, 128
        %1905 = vxpose.xlu0.c.b16.cont [2/8] 0, 128
        %1906 = vxpose.xlu0.c.b16.cont [3/8] 0, 128
        %1907 = vxpose.xlu0.c.b16.cont [4/8] 0, 128
        %1908 = vxpose.xlu0.c.b16.cont [5/8] 0, 128
        %1909 = vxpose.xlu0.c.b16.cont [6/8] 0, 128
        %1910 = vxpose.xlu0.c.b16.cont [7/8] 0, 128
        %1911 = vxpose.xlu0.c.b16.end [8/8] 0, 128
        %v1912 = vpop.trf.xlu0
        %v1913 = vpop.trf.xlu0
        %v1914 = vpop.trf.xlu0
        %v1915 = vpop.trf.xlu0
        %v1916 = vpop.trf.xlu0
        %v1917 = vpop.trf.xlu0
        %v1918 = vpop.trf.xlu0
        %v1919 = vpop.trf.xlu0
        %v1920 = vcombine.low %v1800, %v1864
        %v1922 = vunpack.c.l.s4 1983009808
        %v1923 = vunpack.c.0.s8 %v1922
        %v1924 = vlaneseq
        %v1925 = vshrl.u32 %v1924, 7
        %v1926 = vsub.s32 %v1923, %v1925
        %v1927 = vrot.slane %v1920, %v1926
        %v1928 = vcombine.low %v1832, %v1896
        %v1930 = vunpack.c.l.s4 1983009808
        %v1931 = vunpack.c.0.s8 %v1930
        %v1932 = vlaneseq
        %v1933 = vshrl.u32 %v1932, 7
        %v1934 = vsub.s32 %v1931, %v1933
        %v1935 = vrot.slane %v1928, %v1934
        %v1936 = vcombine.low %v1927, %v1935
        %v1938 = vunpack.c.l.s4 1934713408
        %v1939 = vunpack.c.0.s8 %v1938
        %v1940 = vlaneseq
        %v1941 = vshrl.u32 %v1940, 7
        %v1942 = vsub.s32 %v1939, %v1941
        %v1943 = vrot.slane %v1936, %v1942
        %v1944 = vcombine.high %v1943, 0
        %v1945 = vcombine.low %v1816, %v1880
        %v1947 = vunpack.c.l.s4 1983009808
        %v1948 = vunpack.c.0.s8 %v1947
        %v1949 = vlaneseq
        %v1950 = vshrl.u32 %v1949, 7
        %v1951 = vsub.s32 %v1948, %v1950
        %v1952 = vrot.slane %v1945, %v1951
        %v1953 = vcombine.low %v1848, %v1912
        %v1955 = vunpack.c.l.s4 1983009808
        %v1956 = vunpack.c.0.s8 %v1955
        %v1957 = vlaneseq
        %v1958 = vshrl.u32 %v1957, 7
        %v1959 = vsub.s32 %v1956, %v1958
        %v1960 = vrot.slane %v1953, %v1959
        %v1961 = vcombine.low %v1952, %v1960
        %v1963 = vunpack.c.l.s4 1934713408
        %v1964 = vunpack.c.0.s8 %v1963
        %v1965 = vlaneseq
        %v1966 = vshrl.u32 %v1965, 7
        %v1967 = vsub.s32 %v1964, %v1966
        %v1968 = vrot.slane %v1961, %v1967
        %v1969 = vcombine.high %v1968, 0
        %v1972 = vpack.i.b16 %v1968, %v1943
        %v1973 = vshrl.u32 %v1943, 16
        %v1974 = vshrl.u32 %v1968, 16
        %v1975 = vpack.i.b16 %v1974, %v1973
        %v1978 = vpack.i.b16 %v1969, %v1944
        %v1979 = vshrl.u32 %v1944, 16
        %v1980 = vshrl.u32 %v1969, 16
        %v1981 = vpack.i.b16 %v1980, %v1979
        %v1983 = vsel %vm1326, %v1972, 0
        %v1986 = vsel %vm1326, %v1560, 0
        %1988 = vmatprep.subr.bf16.mxu0 0
        %1989 = vmatpush1.bf16.xpose.msra.mxu0 0
        %1990 = vmatprep.subr.bf16.mxu0 0
        %1991 = vmatpush1.bf16.xpose.msra.mxu0 0
        %1992 = vmatprep.subr.bf16.mxu0 0
        %1993 = vmatpush1.bf16.xpose.msra.mxu0 0
        %1994 = vmatprep.subr.bf16.mxu0 0
        %1995 = vmatpush1.bf16.xpose.msra.mxu0 0
        %1996 = vmatprep.subr.bf16.mxu0 0
        %1997 = vmatpush1.bf16.xpose.msra.mxu0 0
        %1998 = vmatprep.subr.bf16.mxu0 0
        %1999 = vmatpush1.bf16.xpose.msra.mxu0 0
        %2000 = vmatprep.subr.bf16.mxu0 0
        %2001 = vmatpush1.bf16.xpose.msra.mxu0 0
        %2002 = vmatprep.subr.bf16.mxu0 0
        %2003 = vmatpush1.bf16.xpose.msra.mxu0 %v1986
        %2004 = vmatprep.subr.bf16.mxu0 0
        %2005 = vmatpush2.bf16.xpose.msra.mxu0 0
        %2006 = vmatprep.subr.bf16.mxu0 0
        %2007 = vmatpush2.bf16.xpose.msra.mxu0 0
        %2008 = vmatprep.subr.bf16.mxu0 0
        %2009 = vmatpush2.bf16.xpose.msra.mxu0 0
        %2010 = vmatprep.subr.bf16.mxu0 0
        %2011 = vmatpush2.bf16.xpose.msra.mxu0 0
        %2012 = vmatprep.subr.bf16.mxu0 0
        %2013 = vmatpush2.bf16.xpose.msra.mxu0 0
        %2014 = vmatprep.subr.bf16.mxu0 0
        %2015 = vmatpush2.bf16.xpose.msra.mxu0 0
        %2016 = vmatprep.subr.bf16.mxu0 0
        %2017 = vmatpush2.bf16.xpose.msra.mxu0 0
        %2018 = vmatprep.subr.bf16.mxu0 0
        %2019 = vmatpush2.bf16.xpose.msra.mxu0 0
        %2020 = vmatprep.mubr.bf16.mxu0 0
        %2021 = vmatmul.mubr.bf16.gmra.mxu0 %v1983
        %v2022 = vpop.f32.mrf.mxu0
        %v2023 = vadd.f32 0.0, %v2022
        %v2024 = vpop.f32.mrf.mxu0
        %v2025 = vpop.f32.mrf.mxu0
        %v2026 = vpop.f32.mrf.mxu0
        %2027 = vdwg.mxu0
        %v2029 = vsel %vm1326, %v1975, 0
        %v2032 = vsel %vm1326, %v1561, 0
        %2034 = vmatprep.subr.bf16.mxu0 0
        %2035 = vmatpush1.bf16.xpose.msra.mxu0 0
        %2036 = vmatprep.subr.bf16.mxu0 0
        %2037 = vmatpush1.bf16.xpose.msra.mxu0 0
        %2038 = vmatprep.subr.bf16.mxu0 0
        %2039 = vmatpush1.bf16.xpose.msra.mxu0 0
        %2040 = vmatprep.subr.bf16.mxu0 0
        %2041 = vmatpush1.bf16.xpose.msra.mxu0 0
        %2042 = vmatprep.subr.bf16.mxu0 0
        %2043 = vmatpush1.bf16.xpose.msra.mxu0 0
        %2044 = vmatprep.subr.bf16.mxu0 0
        %2045 = vmatpush1.bf16.xpose.msra.mxu0 0
        %2046 = vmatprep.subr.bf16.mxu0 0
        %2047 = vmatpush1.bf16.xpose.msra.mxu0 0
        %2048 = vmatprep.subr.bf16.mxu0 0
        %2049 = vmatpush1.bf16.xpose.msra.mxu0 %v2032
        %2050 = vmatprep.subr.bf16.mxu0 0
        %2051 = vmatpush2.bf16.xpose.msra.mxu0 0
        %2052 = vmatprep.subr.bf16.mxu0 0
        %2053 = vmatpush2.bf16.xpose.msra.mxu0 0
        %2054 = vmatprep.subr.bf16.mxu0 0
        %2055 = vmatpush2.bf16.xpose.msra.mxu0 0
        %2056 = vmatprep.subr.bf16.mxu0 0
        %2057 = vmatpush2.bf16.xpose.msra.mxu0 0
        %2058 = vmatprep.subr.bf16.mxu0 0
        %2059 = vmatpush2.bf16.xpose.msra.mxu0 0
        %2060 = vmatprep.subr.bf16.mxu0 0
        %2061 = vmatpush2.bf16.xpose.msra.mxu0 0
        %2062 = vmatprep.subr.bf16.mxu0 0
        %2063 = vmatpush2.bf16.xpose.msra.mxu0 0
        %2064 = vmatprep.subr.bf16.mxu0 0
        %2065 = vmatpush2.bf16.xpose.msra.mxu0 0
        %2066 = vmatprep.mubr.bf16.mxu0 0
        %2067 = vmatmul.mubr.bf16.gmra.mxu0 %v2029
        %v2068 = vpop.f32.mrf.mxu0
        %v2069 = vadd.f32 0.0, %v2068
        %v2070 = vpop.f32.mrf.mxu0
        %v2071 = vpop.f32.mrf.mxu0
        %v2072 = vpop.f32.mrf.mxu0
        %2073 = vdwg.mxu0
        %v2075 = vsel %vm1326, %v1978, 0
        %v2078 = vsel %vm1326, %v1562, 0
        %2080 = vmatprep.subr.bf16.mxu0 0
        %2081 = vmatpush1.bf16.xpose.msra.mxu0 0
        %2082 = vmatprep.subr.bf16.mxu0 0
        %2083 = vmatpush1.bf16.xpose.msra.mxu0 0
        %2084 = vmatprep.subr.bf16.mxu0 0
        %2085 = vmatpush1.bf16.xpose.msra.mxu0 0
        %2086 = vmatprep.subr.bf16.mxu0 0
        %2087 = vmatpush1.bf16.xpose.msra.mxu0 0
        %2088 = vmatprep.subr.bf16.mxu0 0
        %2089 = vmatpush1.bf16.xpose.msra.mxu0 0
        %2090 = vmatprep.subr.bf16.mxu0 0
        %2091 = vmatpush1.bf16.xpose.msra.mxu0 0
        %2092 = vmatprep.subr.bf16.mxu0 0
        %2093 = vmatpush1.bf16.xpose.msra.mxu0 0
        %2094 = vmatprep.subr.bf16.mxu0 0
        %2095 = vmatpush1.bf16.xpose.msra.mxu0 %v2078
        %2096 = vmatprep.subr.bf16.mxu0 0
        %2097 = vmatpush2.bf16.xpose.msra.mxu0 0
        %2098 = vmatprep.subr.bf16.mxu0 0
        %2099 = vmatpush2.bf16.xpose.msra.mxu0 0
        %2100 = vmatprep.subr.bf16.mxu0 0
        %2101 = vmatpush2.bf16.xpose.msra.mxu0 0
        %2102 = vmatprep.subr.bf16.mxu0 0
        %2103 = vmatpush2.bf16.xpose.msra.mxu0 0
        %2104 = vmatprep.subr.bf16.mxu0 0
        %2105 = vmatpush2.bf16.xpose.msra.mxu0 0
        %2106 = vmatprep.subr.bf16.mxu0 0
        %2107 = vmatpush2.bf16.xpose.msra.mxu0 0
        %2108 = vmatprep.subr.bf16.mxu0 0
        %2109 = vmatpush2.bf16.xpose.msra.mxu0 0
        %2110 = vmatprep.subr.bf16.mxu0 0
        %2111 = vmatpush2.bf16.xpose.msra.mxu0 0
        %2112 = vmatprep.mubr.bf16.mxu0 0
        %2113 = vmatmul.mubr.bf16.gmra.mxu0 %v2075
        %v2114 = vpop.f32.mrf.mxu0
        %v2115 = vadd.f32 0.0, %v2114
        %v2116 = vpop.f32.mrf.mxu0
        %v2117 = vpop.f32.mrf.mxu0
        %v2118 = vpop.f32.mrf.mxu0
        %2119 = vdwg.mxu0
        %v2121 = vsel %vm1326, %v1981, 0
        %v2124 = vsel %vm1326, %v1563, 0
        %2126 = vmatprep.subr.bf16.mxu0 0
        %2127 = vmatpush1.bf16.xpose.msra.mxu0 0
        %2128 = vmatprep.subr.bf16.mxu0 0
        %2129 = vmatpush1.bf16.xpose.msra.mxu0 0
        %2130 = vmatprep.subr.bf16.mxu0 0
        %2131 = vmatpush1.bf16.xpose.msra.mxu0 0
        %2132 = vmatprep.subr.bf16.mxu0 0
        %2133 = vmatpush1.bf16.xpose.msra.mxu0 0
        %2134 = vmatprep.subr.bf16.mxu0 0
        %2135 = vmatpush1.bf16.xpose.msra.mxu0 0
        %2136 = vmatprep.subr.bf16.mxu0 0
        %2137 = vmatpush1.bf16.xpose.msra.mxu0 0
        %2138 = vmatprep.subr.bf16.mxu0 0
        %2139 = vmatpush1.bf16.xpose.msra.mxu0 0
        %2140 = vmatprep.subr.bf16.mxu0 0
        %2141 = vmatpush1.bf16.xpose.msra.mxu0 %v2124
        %2142 = vmatprep.subr.bf16.mxu0 0
        %2143 = vmatpush2.bf16.xpose.msra.mxu0 0
        %2144 = vmatprep.subr.bf16.mxu0 0
        %2145 = vmatpush2.bf16.xpose.msra.mxu0 0
        %2146 = vmatprep.subr.bf16.mxu0 0
        %2147 = vmatpush2.bf16.xpose.msra.mxu0 0
        %2148 = vmatprep.subr.bf16.mxu0 0
        %2149 = vmatpush2.bf16.xpose.msra.mxu0 0
        %2150 = vmatprep.subr.bf16.mxu0 0
        %2151 = vmatpush2.bf16.xpose.msra.mxu0 0
        %2152 = vmatprep.subr.bf16.mxu0 0
        %2153 = vmatpush2.bf16.xpose.msra.mxu0 0
        %2154 = vmatprep.subr.bf16.mxu0 0
        %2155 = vmatpush2.bf16.xpose.msra.mxu0 0
        %2156 = vmatprep.subr.bf16.mxu0 0
        %2157 = vmatpush2.bf16.xpose.msra.mxu0 0
        %2158 = vmatprep.mubr.bf16.mxu0 0
        %2159 = vmatmul.mubr.bf16.gmra.mxu0 %v2121
        %v2160 = vpop.f32.mrf.mxu0
        %v2161 = vadd.f32 0.0, %v2160
        %v2162 = vpop.f32.mrf.mxu0
        %v2163 = vpop.f32.mrf.mxu0
        %v2164 = vpop.f32.mrf.mxu0
        %2165 = vdwg.mxu0
        %2166 = vxpose.xlu0.b32.start [1/16] %v2023, 128
        %2167 = vxpose.xlu0.b32.cont [2/16] 0.0, 128
        %2168 = vxpose.xlu0.b32.cont [3/16] 0.0, 128
        %2169 = vxpose.xlu0.b32.cont [4/16] 0.0, 128
        %2170 = vxpose.xlu0.b32.cont [5/16] 0.0, 128
        %2171 = vxpose.xlu0.b32.cont [6/16] 0.0, 128
        %2172 = vxpose.xlu0.b32.cont [7/16] 0.0, 128
        %2173 = vxpose.xlu0.b32.cont [8/16] 0.0, 128
        %2174 = vxpose.xlu0.b32.cont [9/16] 0.0, 128
        %2175 = vxpose.xlu0.b32.cont [10/16] 0.0, 128
        %2176 = vxpose.xlu0.b32.cont [11/16] 0.0, 128
        %2177 = vxpose.xlu0.b32.cont [12/16] 0.0, 128
        %2178 = vxpose.xlu0.b32.cont [13/16] 0.0, 128
        %2179 = vxpose.xlu0.b32.cont [14/16] 0.0, 128
        %2180 = vxpose.xlu0.b32.cont [15/16] 0.0, 128
        %2181 = vxpose.xlu0.b32.end [16/16] 0.0, 128
        %v2182 = vpop.trf.xlu0
        %v2183 = vpop.trf.xlu0
        %v2184 = vpop.trf.xlu0
        %v2185 = vpop.trf.xlu0
        %v2186 = vpop.trf.xlu0
        %v2187 = vpop.trf.xlu0
        %v2188 = vpop.trf.xlu0
        %v2189 = vpop.trf.xlu0
        %v2190 = vpop.trf.xlu0
        %v2191 = vpop.trf.xlu0
        %v2192 = vpop.trf.xlu0
        %v2193 = vpop.trf.xlu0
        %v2194 = vpop.trf.xlu0
        %v2195 = vpop.trf.xlu0
        %v2196 = vpop.trf.xlu0
        %v2197 = vpop.trf.xlu0
        %2198 = vxpose.xlu0.b32.start [1/16] %v2069, 128
        %2199 = vxpose.xlu0.b32.cont [2/16] 0.0, 128
        %2200 = vxpose.xlu0.b32.cont [3/16] 0.0, 128
        %2201 = vxpose.xlu0.b32.cont [4/16] 0.0, 128
        %2202 = vxpose.xlu0.b32.cont [5/16] 0.0, 128
        %2203 = vxpose.xlu0.b32.cont [6/16] 0.0, 128
        %2204 = vxpose.xlu0.b32.cont [7/16] 0.0, 128
        %2205 = vxpose.xlu0.b32.cont [8/16] 0.0, 128
        %2206 = vxpose.xlu0.b32.cont [9/16] 0.0, 128
        %2207 = vxpose.xlu0.b32.cont [10/16] 0.0, 128
        %2208 = vxpose.xlu0.b32.cont [11/16] 0.0, 128
        %2209 = vxpose.xlu0.b32.cont [12/16] 0.0, 128
        %2210 = vxpose.xlu0.b32.cont [13/16] 0.0, 128
        %2211 = vxpose.xlu0.b32.cont [14/16] 0.0, 128
        %2212 = vxpose.xlu0.b32.cont [15/16] 0.0, 128
        %2213 = vxpose.xlu0.b32.end [16/16] 0.0, 128
        %v2214 = vpop.trf.xlu0
        %v2215 = vpop.trf.xlu0
        %v2216 = vpop.trf.xlu0
        %v2217 = vpop.trf.xlu0
        %v2218 = vpop.trf.xlu0
        %v2219 = vpop.trf.xlu0
        %v2220 = vpop.trf.xlu0
        %v2221 = vpop.trf.xlu0
        %v2222 = vpop.trf.xlu0
        %v2223 = vpop.trf.xlu0
        %v2224 = vpop.trf.xlu0
        %v2225 = vpop.trf.xlu0
        %v2226 = vpop.trf.xlu0
        %v2227 = vpop.trf.xlu0
        %v2228 = vpop.trf.xlu0
        %v2229 = vpop.trf.xlu0
        %2230 = vxpose.xlu0.b32.start [1/16] %v2115, 128
        %2231 = vxpose.xlu0.b32.cont [2/16] 0.0, 128
        %2232 = vxpose.xlu0.b32.cont [3/16] 0.0, 128
        %2233 = vxpose.xlu0.b32.cont [4/16] 0.0, 128
        %2234 = vxpose.xlu0.b32.cont [5/16] 0.0, 128
        %2235 = vxpose.xlu0.b32.cont [6/16] 0.0, 128
        %2236 = vxpose.xlu0.b32.cont [7/16] 0.0, 128
        %2237 = vxpose.xlu0.b32.cont [8/16] 0.0, 128
        %2238 = vxpose.xlu0.b32.cont [9/16] 0.0, 128
        %2239 = vxpose.xlu0.b32.cont [10/16] 0.0, 128
        %2240 = vxpose.xlu0.b32.cont [11/16] 0.0, 128
        %2241 = vxpose.xlu0.b32.cont [12/16] 0.0, 128
        %2242 = vxpose.xlu0.b32.cont [13/16] 0.0, 128
        %2243 = vxpose.xlu0.b32.cont [14/16] 0.0, 128
        %2244 = vxpose.xlu0.b32.cont [15/16] 0.0, 128
        %2245 = vxpose.xlu0.b32.end [16/16] 0.0, 128
        %v2246 = vpop.trf.xlu0
        %v2247 = vpop.trf.xlu0
        %v2248 = vpop.trf.xlu0
        %v2249 = vpop.trf.xlu0
        %v2250 = vpop.trf.xlu0
        %v2251 = vpop.trf.xlu0
        %v2252 = vpop.trf.xlu0
        %v2253 = vpop.trf.xlu0
        %v2254 = vpop.trf.xlu0
        %v2255 = vpop.trf.xlu0
        %v2256 = vpop.trf.xlu0
        %v2257 = vpop.trf.xlu0
        %v2258 = vpop.trf.xlu0
        %v2259 = vpop.trf.xlu0
        %v2260 = vpop.trf.xlu0
        %v2261 = vpop.trf.xlu0
        %2262 = vxpose.xlu0.b32.start [1/16] %v2161, 128
        %2263 = vxpose.xlu0.b32.cont [2/16] 0.0, 128
        %2264 = vxpose.xlu0.b32.cont [3/16] 0.0, 128
        %2265 = vxpose.xlu0.b32.cont [4/16] 0.0, 128
        %2266 = vxpose.xlu0.b32.cont [5/16] 0.0, 128
        %2267 = vxpose.xlu0.b32.cont [6/16] 0.0, 128
        %2268 = vxpose.xlu0.b32.cont [7/16] 0.0, 128
        %2269 = vxpose.xlu0.b32.cont [8/16] 0.0, 128
        %2270 = vxpose.xlu0.b32.cont [9/16] 0.0, 128
        %2271 = vxpose.xlu0.b32.cont [10/16] 0.0, 128
        %2272 = vxpose.xlu0.b32.cont [11/16] 0.0, 128
        %2273 = vxpose.xlu0.b32.cont [12/16] 0.0, 128
        %2274 = vxpose.xlu0.b32.cont [13/16] 0.0, 128
        %2275 = vxpose.xlu0.b32.cont [14/16] 0.0, 128
        %2276 = vxpose.xlu0.b32.cont [15/16] 0.0, 128
        %2277 = vxpose.xlu0.b32.end [16/16] 0.0, 128
        %v2278 = vpop.trf.xlu0
        %v2279 = vpop.trf.xlu0
        %v2280 = vpop.trf.xlu0
        %v2281 = vpop.trf.xlu0
        %v2282 = vpop.trf.xlu0
        %v2283 = vpop.trf.xlu0
        %v2284 = vpop.trf.xlu0
        %v2285 = vpop.trf.xlu0
        %v2286 = vpop.trf.xlu0
        %v2287 = vpop.trf.xlu0
        %v2288 = vpop.trf.xlu0
        %v2289 = vpop.trf.xlu0
        %v2290 = vpop.trf.xlu0
        %v2291 = vpop.trf.xlu0
        %v2292 = vpop.trf.xlu0
        %v2293 = vpop.trf.xlu0
        %v2294 = vcombine.low %v2182, %v2246
        %v2295 = vcombine.high %v2182, %v2246
        %v2297 = vunpack.c.l.s4 1983009808
        %v2298 = vunpack.c.0.s8 %v2297
        %v2299 = vlaneseq
        %v2300 = vshrl.u32 %v2299, 7
        %v2301 = vsub.s32 %v2298, %v2300
        %v2302 = vrot.slane %v2294, %v2301
        %v2304 = vunpack.c.l.s4 1983009808
        %v2305 = vunpack.c.0.s8 %v2304
        %v2306 = vlaneseq
        %v2307 = vshrl.u32 %v2306, 7
        %v2308 = vsub.s32 %v2305, %v2307
        %v2309 = vrot.slane %v2295, %v2308
        %v2310 = vcombine.low %v2214, %v2278
        %v2311 = vcombine.high %v2214, %v2278
        %v2313 = vunpack.c.l.s4 1983009808
        %v2314 = vunpack.c.0.s8 %v2313
        %v2315 = vlaneseq
        %v2316 = vshrl.u32 %v2315, 7
        %v2317 = vsub.s32 %v2314, %v2316
        %v2318 = vrot.slane %v2310, %v2317
        %v2320 = vunpack.c.l.s4 1983009808
        %v2321 = vunpack.c.0.s8 %v2320
        %v2322 = vlaneseq
        %v2323 = vshrl.u32 %v2322, 7
        %v2324 = vsub.s32 %v2321, %v2323
        %v2325 = vrot.slane %v2311, %v2324
        %v2326 = vcombine.low %v2302, %v2318
        %v2327 = vcombine.high %v2302, %v2318
        %v2329 = vunpack.c.l.s4 1934713408
        %v2330 = vunpack.c.0.s8 %v2329
        %v2331 = vlaneseq
        %v2332 = vshrl.u32 %v2331, 7
        %v2333 = vsub.s32 %v2330, %v2332
        %v2334 = vrot.slane %v2326, %v2333
        %v2336 = vunpack.c.l.s4 1934713408
        %v2337 = vunpack.c.0.s8 %v2336
        %v2338 = vlaneseq
        %v2339 = vshrl.u32 %v2338, 7
        %v2340 = vsub.s32 %v2337, %v2339
        %v2341 = vrot.slane %v2327, %v2340
        %v2342 = vcombine.low %v2309, %v2325
        %v2343 = vcombine.high %v2309, %v2325
        %v2345 = vunpack.c.l.s4 1934713408
        %v2346 = vunpack.c.0.s8 %v2345
        %v2347 = vlaneseq
        %v2348 = vshrl.u32 %v2347, 7
        %v2349 = vsub.s32 %v2346, %v2348
        %v2350 = vrot.slane %v2342, %v2349
        %v2352 = vunpack.c.l.s4 1934713408
        %v2353 = vunpack.c.0.s8 %v2352
        %v2354 = vlaneseq
        %v2355 = vshrl.u32 %v2354, 7
        %v2356 = vsub.s32 %v2353, %v2355
        %v2357 = vrot.slane %v2343, %v2356
        %v2358 = vcombine.high %v2334, 0.0
        %v2359 = vcombine.high %v2341, 0.0
        %v2360 = vcombine.high %v2350, 0.0
        %v2361 = vcombine.high %v2357, 0.0
        %v2362 = vcombine.low %v2334, %v2341
        %v2364 = vunpack.c.l.s4 1983009808
        %v2365 = vunpack.c.0.s8 %v2364
        %v2366 = vlaneseq
        %v2367 = vshrl.u32 %v2366, 7
        %v2368 = vsub.s32 %v2365, %v2367
        %v2369 = vrot.slane %v2362, %v2368
        %v2370 = vcombine.low %v2358, %v2359
        %v2372 = vunpack.c.l.s4 1983009808
        %v2373 = vunpack.c.0.s8 %v2372
        %v2374 = vlaneseq
        %v2375 = vshrl.u32 %v2374, 7
        %v2376 = vsub.s32 %v2373, %v2375
        %v2377 = vrot.slane %v2370, %v2376
        %v2378 = vcombine.low %v2350, %v2357
        %v2380 = vunpack.c.l.s4 1983009808
        %v2381 = vunpack.c.0.s8 %v2380
        %v2382 = vlaneseq
        %v2383 = vshrl.u32 %v2382, 7
        %v2384 = vsub.s32 %v2381, %v2383
        %v2385 = vrot.slane %v2378, %v2384
        %v2386 = vcombine.low %v2360, %v2361
        %v2388 = vunpack.c.l.s4 1983009808
        %v2389 = vunpack.c.0.s8 %v2388
        %v2390 = vlaneseq
        %v2391 = vshrl.u32 %v2390, 7
        %v2392 = vsub.s32 %v2389, %v2391
        %v2393 = vrot.slane %v2386, %v2392
        %v2394 = vcombine.low %v2369, %v2377
        %v2395 = vcombine.high %v2369, %v2377
        %v2397 = vunpack.c.l.s4 1934713408
        %v2398 = vunpack.c.0.s8 %v2397
        %v2399 = vlaneseq
        %v2400 = vshrl.u32 %v2399, 7
        %v2401 = vsub.s32 %v2398, %v2400
        %v2402 = vrot.slane %v2394, %v2401
        %v2404 = vunpack.c.l.s4 1934713408
        %v2405 = vunpack.c.0.s8 %v2404
        %v2406 = vlaneseq
        %v2407 = vshrl.u32 %v2406, 7
        %v2408 = vsub.s32 %v2405, %v2407
        %v2409 = vrot.slane %v2395, %v2408
        %v2410 = vcombine.low %v2385, %v2393
        %v2411 = vcombine.high %v2385, %v2393
        %v2413 = vunpack.c.l.s4 1934713408
        %v2414 = vunpack.c.0.s8 %v2413
        %v2415 = vlaneseq
        %v2416 = vshrl.u32 %v2415, 7
        %v2417 = vsub.s32 %v2414, %v2416
        %v2418 = vrot.slane %v2410, %v2417
        %v2420 = vunpack.c.l.s4 1934713408
        %v2421 = vunpack.c.0.s8 %v2420
        %v2422 = vlaneseq
        %v2423 = vshrl.u32 %v2422, 7
        %v2424 = vsub.s32 %v2421, %v2423
        %v2425 = vrot.slane %v2411, %v2424
        %v2426 = vcombine.low %v2402, %v2418
        %v2427 = vcombine.high %v2402, %v2418
        %v2428 = vcombine.low %v2409, %v2425
        %v2429 = vcombine.high %v2409, %v2425
        %2431 = vrot.lane.b32.xlu0 %v2427, 8
        %v2432 = vpop.permute.xlu0 %2431
        %2435 = vrot.lane.b32.xlu0 %v2428, 16
        %v2436 = vpop.permute.xlu0 %2435
        %2439 = vrot.lane.b32.xlu0 %v2429, 24
        %v2440 = vpop.permute.xlu0 %2439
        %v2442 = vsel %vm1326, %v2426, %v2432
        %vm2443 = vcmask 130048
        %v2444 = vsel %vm2443, %v2442, %v2436
        %vm2445 = vcmask 195584
        %v2446 = vsel %vm2445, %v2444, %v2440
        %v2447 = vpack.c.bf16 %v2446, %v2446
        %v2448 = vld [vmem:[%s3] sm:$0xf]
        %v2449 = vld [vmem:[%s3 + $0x4] sm:$0xf]
        %v2450 = vld [vmem:[%s3 + $0x8] sm:$0xf]
        %v2451 = vld [vmem:[%s3 + $0xc] sm:$0xf]
        %v2452 = vld [vmem:[#allocation5] sm:$0x1]
        %v2454 = vlaneseq
        %v2455 = vshrl.u32 %v2454, 7
        %v2456 = vsub.s32 0, %v2455
        %v2457 = vrot.slane %v2452, %v2456
        %v2463 = vunpack.c.l.b16 %v2448
        %v2464 = vunpack.c.l.b16 %v2449
        %v2465 = vunpack.c.l.b16 %v2450
        %v2466 = vunpack.c.l.b16 %v2451
        %v2467 = vpack.c.b16 %v2464, %v2463
        %v2468 = vpack.c.b16 %v2466, %v2465
        %v2472 = vsel %vm540, %v2447, 0
        %2474 = vmatprep.subr.bf16.mxu0 0
        %2475 = vmatpush1.bf16.msra.mxu0 0
        %2476 = vmatprep.subr.bf16.mxu0 0
        %2477 = vmatpush1.bf16.msra.mxu0 0
        %2478 = vmatprep.subr.bf16.mxu0 0
        %2479 = vmatpush1.bf16.msra.mxu0 0
        %2480 = vmatprep.subr.bf16.mxu0 0
        %2481 = vmatpush1.bf16.msra.mxu0 0
        %2482 = vmatprep.subr.bf16.mxu0 0
        %2483 = vmatpush1.bf16.msra.mxu0 0
        %2484 = vmatprep.subr.bf16.mxu0 0
        %2485 = vmatpush1.bf16.msra.mxu0 0
        %2486 = vmatprep.subr.bf16.mxu0 0
        %2487 = vmatpush1.bf16.msra.mxu0 %v2468
        %2488 = vmatprep.subr.bf16.mxu0 0
        %2489 = vmatpush1.bf16.msra.mxu0 %v2467
        %2490 = vmatprep.subr.bf16.mxu0 0
        %2491 = vmatpush2.bf16.msra.mxu0 0
        %2492 = vmatprep.subr.bf16.mxu0 0
        %2493 = vmatpush2.bf16.msra.mxu0 0
        %2494 = vmatprep.subr.bf16.mxu0 0
        %2495 = vmatpush2.bf16.msra.mxu0 0
        %2496 = vmatprep.subr.bf16.mxu0 0
        %2497 = vmatpush2.bf16.msra.mxu0 0
        %2498 = vmatprep.subr.bf16.mxu0 0
        %2499 = vmatpush2.bf16.msra.mxu0 0
        %2500 = vmatprep.subr.bf16.mxu0 0
        %2501 = vmatpush2.bf16.msra.mxu0 0
        %2502 = vmatprep.subr.bf16.mxu0 0
        %2503 = vmatpush2.bf16.msra.mxu0 0
        %2504 = vmatprep.subr.bf16.mxu0 0
        %2505 = vmatpush2.bf16.msra.mxu0 0
        %2506 = vmatprep.mubr.bf16.mxu0 0
        %2507 = vmatmul.mubr.bf16.gmra.mxu0 %v2472
        %v2508 = vpop.f32.mrf.mxu0
        %v2509 = vadd.f32 %v2457, %v2508
        %v2510 = vpop.f32.mrf.mxu0
        %v2511 = vpop.f32.mrf.mxu0
        %v2512 = vpop.f32.mrf.mxu0
        %2513 = vdwg.mxu0
        %v2514 = vadd.f32 %v515, %v2509
        %v2515 = vld [vmem:[#allocation7] sm:$0x1]
        %v2516 = vld [vmem:[#allocation8] sm:$0x1]
        %v2517 = vsel %vm540, %v2514, 0.0
        %2518 = vadd.xlane.f32.xlu0 %v2517
        %v2519 = vpop.xlane.xlu0 %2518
        %v2520 = vrcp.pop 32.0
        %v2521 = vmul.f32 %v2519, %v2520
        %v2522 = vsub.f32 %v2514, %v2521
        %v2523 = vmul.f32 %v2522, %v2522
        %v2524 = vsel %vm540, %v2523, 0.0
        %2525 = vadd.xlane.f32.xlu0 %v2524
        %v2526 = vpop.xlane.xlu0 %2525
        %v2527 = vmul.f32 %v2526, %v2520
        %v2528 = vadd.f32 %v2527, 1e-05
        %v2529 = vrsqrt.pop %v2528
        %v2530 = vmul.f32 %v2522, %v2529
        %v2532 = vlaneseq
        %v2533 = vshrl.u32 %v2532, 7
        %v2534 = vsub.s32 0, %v2533
        %v2535 = vrot.slane %v2515, %v2534
        %v2537 = vmul.f32 %v2530, %v2535
        %v2539 = vlaneseq
        %v2540 = vshrl.u32 %v2539, 7
        %v2541 = vsub.s32 0, %v2540
        %v2542 = vrot.slane %v2516, %v2541
        %v2544 = vadd.f32 %v2537, %v2542
        %v2545 = vpack.c.bf16 %v2544, %v2544
        %v2546 = vld [vmem:[#allocation10] sm:$0xf]
        %v2547 = vld [vmem:[#allocation10 + $0x4] sm:$0xf]
        %v2548 = vld [vmem:[#allocation10 + $0x8] sm:$0xf]
        %v2549 = vld [vmem:[#allocation10 + $0xc] sm:$0xf]
        %v2550 = vld [vmem:[#allocation11] sm:$0x1]
        %v2552 = vlaneseq
        %v2553 = vshrl.u32 %v2552, 7
        %v2554 = vsub.s32 0, %v2553
        %v2555 = vrot.slane %v2550, %v2554
        %v2561 = vunpack.c.l.b16 %v2546
        %v2562 = vunpack.c.l.b16 %v2547
        %v2563 = vunpack.c.l.b16 %v2548
        %v2564 = vunpack.c.l.b16 %v2549
        %v2565 = vpack.c.b16 %v2562, %v2561
        %v2566 = vpack.c.b16 %v2564, %v2563
        %v2570 = vsel %vm540, %v2545, 0
        %2572 = vmatprep.subr.bf16.mxu0 0
        %2573 = vmatpush1.bf16.msra.mxu0 0
        %2574 = vmatprep.subr.bf16.mxu0 0
        %2575 = vmatpush1.bf16.msra.mxu0 0
        %2576 = vmatprep.subr.bf16.mxu0 0
        %2577 = vmatpush1.bf16.msra.mxu0 0
        %2578 = vmatprep.subr.bf16.mxu0 0
        %2579 = vmatpush1.bf16.msra.mxu0 0
        %2580 = vmatprep.subr.bf16.mxu0 0
        %2581 = vmatpush1.bf16.msra.mxu0 0
        %2582 = vmatprep.subr.bf16.mxu0 0
        %2583 = vmatpush1.bf16.msra.mxu0 0
        %2584 = vmatprep.subr.bf16.mxu0 0
        %2585 = vmatpush1.bf16.msra.mxu0 %v2566
        %2586 = vmatprep.subr.bf16.mxu0 0
        %2587 = vmatpush1.bf16.msra.mxu0 %v2565
        %2588 = vmatprep.subr.bf16.mxu0 0
        %2589 = vmatpush2.bf16.msra.mxu0 0
        %2590 = vmatprep.subr.bf16.mxu0 0
        %2591 = vmatpush2.bf16.msra.mxu0 0
        %2592 = vmatprep.subr.bf16.mxu0 0
        %2593 = vmatpush2.bf16.msra.mxu0 0
        %2594 = vmatprep.subr.bf16.mxu0 0
        %2595 = vmatpush2.bf16.msra.mxu0 0
        %2596 = vmatprep.subr.bf16.mxu0 0
        %2597 = vmatpush2.bf16.msra.mxu0 0
        %2598 = vmatprep.subr.bf16.mxu0 0
        %2599 = vmatpush2.bf16.msra.mxu0 0
        %2600 = vmatprep.subr.bf16.mxu0 0
        %2601 = vmatpush2.bf16.msra.mxu0 0
        %2602 = vmatprep.subr.bf16.mxu0 0
        %2603 = vmatpush2.bf16.msra.mxu0 0
        %2604 = vmatprep.mubr.bf16.mxu0 0
        %2605 = vmatmul.mubr.bf16.gmra.mxu0 %v2570
        %v2606 = vpop.f32.mrf.mxu0
        %v2607 = vadd.f32 %v2555, %v2606
        %v2608 = vpop.f32.mrf.mxu0
        %v2609 = vpop.f32.mrf.mxu0
        %v2610 = vpop.f32.mrf.mxu0
        %2611 = vdwg.mxu0
        %v2612 = vmax.f32 %v2607, 0.0
        %v2613 = vpack.c.bf16 %v2612, %v2612
        %v2614 = vld [vmem:[%s9] sm:$0xf]
        %v2615 = vld [vmem:[%s9 + $0x4] sm:$0xf]
        %v2616 = vld [vmem:[%s9 + $0x8] sm:$0xf]
        %v2617 = vld [vmem:[%s9 + $0xc] sm:$0xf]
        %v2618 = vld [vmem:[%s9 + $0x10] sm:$0xf]
        %v2619 = vld [vmem:[%s9 + $0x14] sm:$0xf]
        %v2620 = vld [vmem:[%s9 + $0x18] sm:$0xf]
        %v2621 = vld [vmem:[%s9 + $0x1c] sm:$0xf]
        %v2622 = vld [vmem:[%s10] sm:$0x1]
        %v2624 = vlaneseq
        %v2625 = vshrl.u32 %v2624, 7
        %v2626 = vsub.s32 0, %v2625
        %v2627 = vrot.slane %v2622, %v2626
        %v2637 = vunpack.c.l.b16 %v2614
        %v2638 = vunpack.c.l.b16 %v2615
        %v2639 = vunpack.c.l.b16 %v2616
        %v2640 = vunpack.c.l.b16 %v2617
        %v2641 = vunpack.c.l.b16 %v2618
        %v2642 = vunpack.c.l.b16 %v2619
        %v2643 = vunpack.c.l.b16 %v2620
        %v2644 = vunpack.c.l.b16 %v2621
        %v2645 = vpack.c.b16 %v2638, %v2637
        %v2646 = vpack.c.b16 %v2640, %v2639
        %v2647 = vpack.c.b16 %v2642, %v2641
        %v2648 = vpack.c.b16 %v2644, %v2643
        %vm2653 = vcmask 523264
        %v2655 = vsel %vm2653, %v2613, 0
        %2657 = vmatprep.subr.bf16.mxu0 0
        %2658 = vmatpush1.bf16.msra.mxu0 0
        %2659 = vmatprep.subr.bf16.mxu0 0
        %2660 = vmatpush1.bf16.msra.mxu0 0
        %2661 = vmatprep.subr.bf16.mxu0 0
        %2662 = vmatpush1.bf16.msra.mxu0 0
        %2663 = vmatprep.subr.bf16.mxu0 0
        %2664 = vmatpush1.bf16.msra.mxu0 0
        %2665 = vmatprep.subr.bf16.mxu0 0
        %2666 = vmatpush1.bf16.msra.mxu0 %v2648
        %2667 = vmatprep.subr.bf16.mxu0 0
        %2668 = vmatpush1.bf16.msra.mxu0 %v2647
        %2669 = vmatprep.subr.bf16.mxu0 0
        %2670 = vmatpush1.bf16.msra.mxu0 %v2646
        %2671 = vmatprep.subr.bf16.mxu0 0
        %2672 = vmatpush1.bf16.msra.mxu0 %v2645
        %2673 = vmatprep.subr.bf16.mxu0 0
        %2674 = vmatpush2.bf16.msra.mxu0 0
        %2675 = vmatprep.subr.bf16.mxu0 0
        %2676 = vmatpush2.bf16.msra.mxu0 0
        %2677 = vmatprep.subr.bf16.mxu0 0
        %2678 = vmatpush2.bf16.msra.mxu0 0
        %2679 = vmatprep.subr.bf16.mxu0 0
        %2680 = vmatpush2.bf16.msra.mxu0 0
        %2681 = vmatprep.subr.bf16.mxu0 0
        %2682 = vmatpush2.bf16.msra.mxu0 0
        %2683 = vmatprep.subr.bf16.mxu0 0
        %2684 = vmatpush2.bf16.msra.mxu0 0
        %2685 = vmatprep.subr.bf16.mxu0 0
        %2686 = vmatpush2.bf16.msra.mxu0 0
        %2687 = vmatprep.subr.bf16.mxu0 0
        %2688 = vmatpush2.bf16.msra.mxu0 0
        %2689 = vmatprep.mubr.bf16.mxu0 0
        %2690 = vmatmul.mubr.bf16.gmra.mxu0 %v2655
        %v2691 = vpop.f32.mrf.mxu0
        %v2692 = vadd.f32 %v2627, %v2691
        %v2693 = vpop.f32.mrf.mxu0
        %v2694 = vpop.f32.mrf.mxu0
        %v2695 = vpop.f32.mrf.mxu0
        %2696 = vdwg.mxu0
        %v2697 = vadd.f32 %v2544, %v2692
        %v2698 = vld [vmem:[%s11] sm:$0x1]
        %v2699 = vld [vmem:[%s12] sm:$0x1]
        %v2700 = vsel %vm540, %v2697, 0.0
        %2701 = vadd.xlane.f32.xlu0 %v2700
        %v2702 = vpop.xlane.xlu0 %2701
        %v2703 = vmul.f32 %v2702, %v2520
        %v2704 = vsub.f32 %v2697, %v2703
        %v2705 = vmul.f32 %v2704, %v2704
        %v2706 = vsel %vm540, %v2705, 0.0
        %2707 = vadd.xlane.f32.xlu0 %v2706
        %v2708 = vpop.xlane.xlu0 %2707
        %v2709 = vmul.f32 %v2708, %v2520
        %v2710 = vadd.f32 %v2709, 1e-05
        %v2711 = vrsqrt.pop %v2710
        %v2712 = vmul.f32 %v2704, %v2711
        %v2714 = vlaneseq
        %v2715 = vshrl.u32 %v2714, 7
        %v2716 = vsub.s32 0, %v2715
        %v2717 = vrot.slane %v2698, %v2716
        %v2719 = vmul.f32 %v2712, %v2717
        %v2721 = vlaneseq
        %v2722 = vshrl.u32 %v2721, 7
        %v2723 = vsub.s32 0, %v2722
        %v2724 = vrot.slane %v2699, %v2723
        %v2726 = vadd.f32 %v2719, %v2724
        %2727 = vst.msk [vmem:[%s509] sm:$0xff] %vm540, %v2726
        %s2728 = sand.u32 %s317, 1
        %s2729 = scalar_lea.sflag [#allocation4], %s2728
        %s2730 = sand.u32 %s317, 1
        %s2731 = smul.addr %s2730, 8
        %s2732 = scalar_lea.vmem [#allocation13], %s2731
        // Predicated region
        $region97: #{tpu_custom_call.1} parent=71 // pred_check
          %p2733 = pneg %p327
        $region98: #{tpu_custom_call.1} parent=71 // pred_check_branch
          %2735 = sbr.rel (%p2733) target = $region100
        $region99: #{tpu_custom_call.1} parent=71 // pred_region
          %s2737 = ssub.s32 128, 128
          %2738 = vsyncadd %s2729, %s2737
          %s2739 = smul.addr %s31, 128
          %s2740 = scalar_lea.hbm %s13, %s2739
          %s2742 = sshll.u32 %s2732, 4
          %s2743 = int_to_ptr.vmem [resolvable:$true] %s2742
          %2745 = dma.vmem_to_hbm [thread:$0]  %s2743, 128, %s2740, %s2729
        $region100: #{tpu_custom_call.1} parent=71 // pred_fallthru
          _
      $region72: #{tpu_custom_call.1} parent=5 // pred_fallthru
        _
      %p2746 = scmp.le.s32.totalorder 2, %s26
      // Predicated region
      $region101: #{tpu_custom_call.1} parent=5 // pred_check
        %p2747 = pneg %p2746
      $region102: #{tpu_custom_call.1} parent=5 // pred_check_branch
        %2749 = sbr.rel (%p2747) target = $region104
      $region103: #{tpu_custom_call.1} parent=5 // pred_region
        %s2750 = ssub.s32 %s26, 2
        // Predicated region
        $region105: #{tpu_custom_call.1} parent=103 // pred_check
          %p2751 = pneg %p333
        $region106: #{tpu_custom_call.1} parent=103 // pred_check_branch
          %2753 = sbr.rel (%p2751) target = $region108
        $region107: #{tpu_custom_call.1} parent=103 // pred_region
          %s2754 = sand.u32 %s318, 1
          %s2755 = scalar_lea.sflag [#allocation4], %s2754
          %s2756 = sand.u32 %s318, 1
          %s2757 = smul.addr %s2756, 8
          %s2758 = scalar_lea.vmem [#allocation13], %s2757
          %2759 = dma.done %s2755, 128
        $region108: #{tpu_custom_call.1} parent=103 // pred_fallthru
          _
      $region104: #{tpu_custom_call.1} parent=5 // pred_fallthru
        _
    $region6: #{tpu_custom_call.1} parent=1 // loop_footer
      %s30 = sadd.s32 1, %s26
    $region7: #{tpu_custom_call.1} parent=1 // loop_footer_branch
      %25 = sbr.rel target = $region3
    $region8: #{tpu_custom_call.1} parent=1 // loop_exit
      _
    %2760 = vsyncpa [#allocation3], 1
    %s2761 = scalar_lea.sflag [#allocation3], 1
    %2762 = vsyncpa %s2761, 1
    %2763 = vsyncpa [#allocation6], 1
    %2764 = vsyncpa [#allocation9], 1
    %2765 = vsyncpa [#allocation12], 1
    %2766 = vsyncpa [#allocation4], 1
    %s2767 = scalar_lea.sflag [#allocation4], 1
    %2768 = vsyncpa %s2767, 1

</llo_original>
